<compile_context>
chip_gen: v5e
topology: v5e:2x2
jax: 0.10.0
libtpu: 0.0.40
codegen_flags: <defaults>
</compile_context>

<pallas_src>
import math

import jax
import jax.numpy as jnp
from jax import lax
from jax.experimental import pallas as pl
from jax.experimental.pallas import tpu as pltpu

BATCH_SIZE = 2
EMBEDDING_DIM = 128
NUM_HEADS = 8
HEAD_DIM = EMBEDDING_DIM // NUM_HEADS
SEQ_LEN = BATCH_SIZE * NUM_HEADS  # 16 (required by the reference mask broadcast)
FFN_DIM = 4 * EMBEDDING_DIM
_NEG = -1.0e9  # kills cross-batch score columns in the packed (multi-batch) layout


# ---------------------------- fused Pallas kernel ----------------------------

def _encoder_layer_kernel(x_ref, wqkv_ref, bm_ref, madd_ref,
                          w1_ref, b1_ref, w2_ref, b2_ref, w3_ref, b3_ref,
                          o_ref):
    H, hd = NUM_HEADS, HEAD_DIM
    R, E = x_ref.shape                      # R = (batches handled this step) * SEQ_LEN
    scale = 1.0 / math.sqrt(hd)

    xf = x_ref[...]                                               # (R, E) f32

    # --- fused QKV projection (head-contiguous columns), bf16 MXU / f32 accum ---
    qkv = jnp.dot(xf.astype(jnp.bfloat16), wqkv_ref[...],
                  preferred_element_type=jnp.float32)             # (R, 3E)
    q = qkv[:, :E]                                                # (R, E)
    k = qkv[:, E:2 * E].astype(jnp.bfloat16)                      # (R, E)
    v = qkv[:, 2 * E:3 * E].astype(jnp.bfloat16)                  # (R, E)

    # --- attention: heads stacked along the sublane axis ------------------------
    # stacked row index r = h*R + w, where w is the activation row of this step.
    q_t = jnp.concatenate([q] * H, axis=0)                        # (H*R, E) sublane tile
    qs = (q_t * bm_ref[...]).astype(jnp.bfloat16)                 # keep head h's columns
    scores = lax.dot_general(qs, k, (((1,), (1,)), ((), ())),
                             preferred_element_type=jnp.float32)  # (H*R, R)
    scores = scores * scale + madd_ref[...]                       # ref mask (+ batch block)
    mmax = jnp.max(scores, axis=-1, keepdims=True)
    p = jnp.exp(scores - mmax)
    p = p * pl.reciprocal(jnp.sum(p, axis=-1, keepdims=True), approx=True)
    ow = jnp.dot(p.astype(jnp.bfloat16), v,
                 preferred_element_type=jnp.float32)              # (H*R, E)
    ow = ow * bm_ref[...]                                         # keep own head's columns
    attn = ow[0:R, :]                                             # head merge: sublane slices
    for h in range(1, H):
        attn = attn + ow[h * R:(h + 1) * R, :]                    # (R, E) head-contiguous

    # --- linear_1 + residual + LN1 + FFN + residual + LN2 -----------------------
    def layer_norm(t):
        # Exact reproduction of the reference LayerNormalization:
        # unbiased variance, divide by the *variance* (not std), no eps.
        mean = jnp.mean(t, axis=-1, keepdims=True)
        c = t - mean
        var = jnp.sum(c * c, axis=-1, keepdims=True) * (1.0 / (t.shape[-1] - 1))
        return c / var                                            # exact divide

    y1 = jnp.dot(attn.astype(jnp.bfloat16), w1_ref[...],
                 preferred_element_type=jnp.float32) + b1_ref[...]
    ln1 = layer_norm(y1 + xf)
    hmid = jnp.maximum(
        jnp.dot(ln1.astype(jnp.bfloat16), w2_ref[...],
                preferred_element_type=jnp.float32) + b2_ref[...], 0.0)
    y3 = jnp.dot(hmid.astype(jnp.bfloat16), w3_ref[...],
                 preferred_element_type=jnp.float32) + b3_ref[...]
    o_ref[...] = layer_norm(y3 + ln1)


# ---------------------------- wrapper ----------------------------

def _batches_per_step():
    # v7x has 2 TensorCores per chip: keep one batch per grid step so the "parallel"
    # grid axis is sharded across cores.  v5e/v6e have a single TC, where a serial
    # grid is pure overhead -> fold all batches into one step (32 activation rows).
    try:
        kind = jax.devices()[0].device_kind.lower()
    except Exception:
        kind = ""
    if "v7" in kind and BATCH_SIZE > 1:
        return 1
    return BATCH_SIZE


def encoder_transformer_layer(params, input_embeddings_source,
                              token_attention_masks_source,
                              token_attention_masks_target,
                              encoder_output_embedding=None):
    del token_attention_masks_target, encoder_output_embedding  # unused (encoder path)
    B, S, E = input_embeddings_source.shape
    H, hd = NUM_HEADS, HEAD_DIM
    assert B * H == S, "reference mask broadcast requires seq_len == batch*heads"

    nb = _batches_per_step()            # batches processed per grid step (static)
    nsteps = B // nb
    R = nb * S                          # activation rows per grid step

    # --- one-time weight prep (plain JAX): head-contiguous column layout --------
    # perm maps head-contiguous column (h*hd + d) -> reference interleaved column (d*H + h)
    cn = jnp.arange(E)
    perm = (cn % hd) * H + (cn // hd)
    wqkv = jnp.concatenate([params["w_query"][:, perm],
                            params["w_key"][:, perm],
                            params["w_value"][:, perm]],
                           axis=1).astype(jnp.bfloat16)           # (E, 3E)
    w1t = params["w1"].T[perm, :].astype(jnp.bfloat16)            # (E, E)
    w2t = params["w2"].T.astype(jnp.bfloat16)                     # (E, 4E)
    w3t = params["w3"].T.astype(jnp.bfloat16)                     # (4E, E)

    # --- hoisted masks (built once in the wrapper, DMA'd once) ------------------
    # reference quirk: scores[n, i, j] += madd_row[i // H, j] for EVERY n
    madd_row = jnp.where(token_attention_masks_source == 0, -1000.0,
                         0.0).astype(jnp.float32)                 # (B, S)
    m2d = jnp.repeat(madd_row, H, axis=0)                         # (S, S); row i -> batch i//H
    # packed-layout additive mask (H*R, R): reference mask on batch-diagonal blocks,
    # big negative on cross-batch columns (present only when nb > 1)
    bidx = jnp.arange(R) // S
    cross = jnp.where(bidx[:, None] == bidx[None, :], 0.0, _NEG)  # (R, R)
    madd = jnp.tile(jnp.tile(m2d, (nb, nb)) + cross, (H, 1))      # (H*R, R)
    # head block mask: stacked row block h keeps only the columns of head h
    hrow = jnp.arange(H * R) // R
    hcol = jnp.arange(E) // hd
    bm = (hrow[:, None] == hcol[None, :]).astype(jnp.float32)     # (H*R, E)

    x2 = input_embeddings_source.reshape(B * S, E).astype(jnp.float32)

    out = pl.pallas_call(
        _encoder_layer_kernel,
        grid=(nsteps,),
        in_specs=[
            pl.BlockSpec((R, E), lambda b: (b, 0)),              # x rows for this step
            pl.BlockSpec((E, 3 * E), lambda b: (0, 0)),          # fused QKV weight (bf16)
            pl.BlockSpec((H * R, E), lambda b: (0, 0)),          # head block mask
            pl.BlockSpec((H * R, R), lambda b: (0, 0)),          # additive attention mask
            pl.BlockSpec((E, E), lambda b: (0, 0)),              # w1^T (row-permuted, bf16)
            pl.BlockSpec((1, E), lambda b: (0, 0)),              # b1
            pl.BlockSpec((E, FFN_DIM), lambda b: (0, 0)),        # w2^T (bf16)
            pl.BlockSpec((1, FFN_DIM), lambda b: (0, 0)),        # b2
            pl.BlockSpec((FFN_DIM, E), lambda b: (0, 0)),        # w3^T (bf16)
            pl.BlockSpec((1, E), lambda b: (0, 0)),              # b3
        ],
        out_specs=pl.BlockSpec((R, E), lambda b: (b, 0)),
        out_shape=jax.ShapeDtypeStruct((B * S, E), jnp.float32),
        compiler_params=pltpu.CompilerParams(
            dimension_semantics=("parallel",)),
    )(x2, wqkv, bm, madd,
      w1t, params["b1"][None, :].astype(jnp.float32),
      w2t, params["b2"][None, :].astype(jnp.float32),
      w3t, params["b3"][None, :].astype(jnp.float32))
    return out.reshape(B, S, E)


# ---------------------------- pure-JAX reference ----------------------------

def reference_forward(params, x, mask_source):
    B, S, E = x.shape
    H, hd = NUM_HEADS, HEAD_DIM

    def proj(w):
        t = x.reshape(B * S, E) @ w
        t = t.reshape(B, S, hd, H)
        return jnp.transpose(t, (0, 3, 1, 2)).reshape(B * H, S, hd)

    q, k, v = proj(params["w_query"]), proj(params["w_key"]), proj(params["w_value"])
    scores = jnp.einsum("nsd,ntd->nst", q, k) / math.sqrt(hd)
    m = jnp.where(mask_source == 0, -1000.0, 0.0).astype(jnp.float32)
    m = jnp.repeat(m[:, None, :], H, axis=1).reshape(B * H, S)
    scores = scores + m[None, :, :]  # torch broadcast (S == B*H)
    p = jax.nn.softmax(scores, axis=-1)
    o = jnp.einsum("nst,ntd->nsd", p, v)
    attn = jnp.transpose(o.reshape(B, H, S, hd), (0, 2, 3, 1)).reshape(B, S, E)

    def ln(t):
        mean = jnp.mean(t, axis=-1, keepdims=True)
        var = jnp.sum((t - mean) ** 2, axis=-1, keepdims=True) / (t.shape[-1] - 1)
        return (t - mean) / var

    y1 = attn @ params["w1"].T + params["b1"]
    ln1 = ln(y1 + x)
    h = jax.nn.relu(ln1 @ params["w2"].T + params["b2"])
    y3 = h @ params["w3"].T + params["b3"]
    return ln(y3 + ln1)


# ---------------------------- main ----------------------------

if __name__ == "__main__":
    key = jax.random.PRNGKey(0)
    ks = jax.random.split(key, 10)
    E = EMBEDDING_DIM

    def uni(k, shape, scale=0.05):
        return jax.random.uniform(k, shape, jnp.float32, -scale, scale)

    params = {
        "w_query": uni(ks[0], (E, E)),
        "w_key": uni(ks[1], (E, E)),
        "w_value": uni(ks[2], (E, E)),
        "w1": uni(ks[3], (E, E)), "b1": uni(ks[4], (E,)),          # nn.Linear(E, E)
        "w2": uni(ks[5], (4 * E, E)), "b2": uni(ks[6], (4 * E,)),  # nn.Linear(E, 4E)
        "w3": uni(ks[7], (E, 4 * E)), "b3": uni(ks[8], (E,)),      # nn.Linear(4E, E)
    }

    x = jax.random.normal(ks[9], (BATCH_SIZE, SEQ_LEN, E), jnp.float32)
    mask_source = jnp.ones((BATCH_SIZE, SEQ_LEN), jnp.int32).at[1, -3:].set(0)
    mask_target = jnp.ones((BATCH_SIZE, SEQ_LEN), jnp.int32)  # unused in encoder path

    fwd = jax.jit(encoder_transformer_layer)
    out = jax.block_until_ready(fwd(params, x, mask_source, mask_target))

    ref = reference_forward(params, x, mask_source)
    assert out.shape == (BATCH_SIZE, SEQ_LEN, E)
    assert bool(jnp.all(jnp.isfinite(out)))
    assert bool(jnp.allclose(out, ref, rtol=1e-2, atol=1e-2)), float(
        jnp.max(jnp.abs(out - ref)))
    print("KERNEL_OK")
</pallas_src>

<mosaic_0001>
module attributes {stable_mosaic.version = 11 : i64} {
  func.func @_encoder_layer_kernel(%arg0: i32, %arg1: memref<32x128xf32, #tpu.memory_space<vmem>>, %arg2: memref<128x384xbf16, #tpu.memory_space<vmem>>, %arg3: memref<256x128xf32, #tpu.memory_space<vmem>>, %arg4: memref<256x32xf32, #tpu.memory_space<vmem>>, %arg5: memref<128x128xbf16, #tpu.memory_space<vmem>>, %arg6: memref<1x128xf32, #tpu.memory_space<vmem>>, %arg7: memref<128x512xbf16, #tpu.memory_space<vmem>>, %arg8: memref<1x512xf32, #tpu.memory_space<vmem>>, %arg9: memref<512x128xbf16, #tpu.memory_space<vmem>>, %arg10: memref<1x128xf32, #tpu.memory_space<vmem>>, %arg11: memref<32x128xf32, #tpu.memory_space<vmem>>) attributes {dimension_semantics = [#tpu.dimension_semantics<parallel>], iteration_bounds = array<i64: 1>, scalar_prefetch = 0 : i64, scratch_operands = 0 : i64, tpu.core_type = #tpu.core_type<tc>, window_params = [{transform_indices = @transform_0, window_bounds = array<i64: 32, 128>}, {pipeline_mode = #tpu.pipeline_mode<synchronous>, transform_indices = @transform_1, window_bounds = array<i64: 128, 384>}, {pipeline_mode = #tpu.pipeline_mode<synchronous>, transform_indices = @transform_2, window_bounds = array<i64: 256, 128>}, {pipeline_mode = #tpu.pipeline_mode<synchronous>, transform_indices = @transform_3, window_bounds = array<i64: 256, 32>}, {pipeline_mode = #tpu.pipeline_mode<synchronous>, transform_indices = @transform_4, window_bounds = array<i64: 128, 128>}, {pipeline_mode = #tpu.pipeline_mode<synchronous>, transform_indices = @transform_5, window_bounds = array<i64: 1, 128>}, {pipeline_mode = #tpu.pipeline_mode<synchronous>, transform_indices = @transform_6, window_bounds = array<i64: 128, 512>}, {pipeline_mode = #tpu.pipeline_mode<synchronous>, transform_indices = @transform_7, window_bounds = array<i64: 1, 512>}, {pipeline_mode = #tpu.pipeline_mode<synchronous>, transform_indices = @transform_8, window_bounds = array<i64: 512, 128>}, {pipeline_mode = #tpu.pipeline_mode<synchronous>, transform_indices = @transform_9, window_bounds = array<i64: 1, 128>}, {transform_indices = @transform_10, window_bounds = array<i64: 32, 128>}]} {
    %c0 = arith.constant 0 : index
    %c0_0 = arith.constant 0 : index
    %0 = vector.load %arg1[%c0, %c0_0] : memref<32x128xf32, #tpu.memory_space<vmem>>, vector<32x128xf32>
    %1 = arith.truncf %0 : vector<32x128xf32> to vector<32x128xbf16>
    %c0_1 = arith.constant 0 : index
    %c0_2 = arith.constant 0 : index
    %2 = vector.load %arg2[%c0_1, %c0_2] : memref<128x384xbf16, #tpu.memory_space<vmem>>, vector<128x384xbf16>
    %cst = arith.constant dense<0.000000e+00> : vector<32x384xf32>
    %3 = tpu.matmul %1, %2, %cst {dimension_numbers = #tpu.dot_dimension_numbers<[1], [0], [0], [1], [0, 0, 1, 1], [], []>} : vector<32x128xbf16>, vector<128x384xbf16>, vector<32x384xf32> -> vector<32x384xf32>
    %4 = vector.extract_strided_slice %3 {offsets = [0, 0], sizes = [32, 128], strides = [1, 1]} : vector<32x384xf32> to vector<32x128xf32>
    %5 = vector.extract_strided_slice %3 {offsets = [0, 128], sizes = [32, 128], strides = [1, 1]} : vector<32x384xf32> to vector<32x128xf32>
    %6 = arith.truncf %5 : vector<32x128xf32> to vector<32x128xbf16>
    %7 = vector.extract_strided_slice %3 {offsets = [0, 256], sizes = [32, 128], strides = [1, 1]} : vector<32x384xf32> to vector<32x128xf32>
    %8 = arith.truncf %7 : vector<32x128xf32> to vector<32x128xbf16>
    %9 = tpu.concatenate %4, %4, %4, %4, %4, %4, %4, %4 in 0 : vector<32x128xf32>, vector<32x128xf32>, vector<32x128xf32>, vector<32x128xf32>, vector<32x128xf32>, vector<32x128xf32>, vector<32x128xf32>, vector<32x128xf32> -> vector<256x128xf32>
    %c0_3 = arith.constant 0 : index
    %c0_4 = arith.constant 0 : index
    %10 = vector.load %arg3[%c0_3, %c0_4] : memref<256x128xf32, #tpu.memory_space<vmem>>, vector<256x128xf32>
    %11 = arith.mulf %9, %10 : vector<256x128xf32>
    %12 = arith.truncf %11 : vector<256x128xf32> to vector<256x128xbf16>
    %cst_5 = arith.constant dense<0.000000e+00> : vector<256x32xf32>
    %13 = tpu.matmul %12, %6, %cst_5 {dimension_numbers = #tpu.dot_dimension_numbers<[1], [1], [0], [0], [0, 0, 1, 0], [], []>} : vector<256x128xbf16>, vector<32x128xbf16>, vector<256x32xf32> -> vector<256x32xf32>
    %cst_6 = arith.constant 2.500000e-01 : f32
    %14 = vector.broadcast %cst_6 : f32 to vector<256x32xf32>
    %15 = arith.mulf %13, %14 : vector<256x32xf32>
    %c0_7 = arith.constant 0 : index
    %c0_8 = arith.constant 0 : index
    %16 = vector.load %arg4[%c0_7, %c0_8] : memref<256x32xf32, #tpu.memory_space<vmem>>, vector<256x32xf32>
    %17 = arith.addf %15, %16 : vector<256x32xf32>
    %cst_9 = arith.constant dense<0xFF800000> : vector<256xf32>
    %18 = vector.multi_reduction <maximumf>, %17, %cst_9 [1] : vector<256x32xf32> to vector<256xf32>
    %19 = vector.shape_cast %18 : vector<256xf32> to vector<256x1xf32>
    %20 = vector.broadcast %19 : vector<256x1xf32> to vector<256x32xf32>
    %21 = arith.subf %17, %20 : vector<256x32xf32>
    %22 = math.exp %21 : vector<256x32xf32>
    %cst_10 = arith.constant dense<0.000000e+00> : vector<256xf32>
    %23 = vector.multi_reduction <add>, %22, %cst_10 [1] : vector<256x32xf32> to vector<256xf32>
    %24 = vector.shape_cast %23 : vector<256xf32> to vector<256x1xf32>
    %25 = tpu.reciprocal %24 {approx = true} : vector<256x1xf32> -> vector<256x1xf32>
    %26 = vector.broadcast %25 : vector<256x1xf32> to vector<256x32xf32>
    %27 = arith.mulf %22, %26 : vector<256x32xf32>
    %28 = arith.truncf %27 : vector<256x32xf32> to vector<256x32xbf16>
    %cst_11 = arith.constant dense<0.000000e+00> : vector<256x128xf32>
    %29 = tpu.matmul %28, %8, %cst_11 {dimension_numbers = #tpu.dot_dimension_numbers<[1], [0], [0], [1], [0, 0, 1, 1], [], []>} : vector<256x32xbf16>, vector<32x128xbf16>, vector<256x128xf32> -> vector<256x128xf32>
    %c0_12 = arith.constant 0 : index
    %c0_13 = arith.constant 0 : index
    %30 = vector.load %arg3[%c0_12, %c0_13] : memref<256x128xf32, #tpu.memory_space<vmem>>, vector<256x128xf32>
    %31 = arith.mulf %29, %30 : vector<256x128xf32>
    %32 = vector.extract_strided_slice %31 {offsets = [0, 0], sizes = [32, 128], strides = [1, 1]} : vector<256x128xf32> to vector<32x128xf32>
    %33 = vector.extract_strided_slice %31 {offsets = [32, 0], sizes = [32, 128], strides = [1, 1]} : vector<256x128xf32> to vector<32x128xf32>
    %34 = arith.addf %32, %33 : vector<32x128xf32>
    %35 = vector.extract_strided_slice %31 {offsets = [64, 0], sizes = [32, 128], strides = [1, 1]} : vector<256x128xf32> to vector<32x128xf32>
    %36 = arith.addf %34, %35 : vector<32x128xf32>
    %37 = vector.extract_strided_slice %31 {offsets = [96, 0], sizes = [32, 128], strides = [1, 1]} : vector<256x128xf32> to vector<32x128xf32>
    %38 = arith.addf %36, %37 : vector<32x128xf32>
    %39 = vector.extract_strided_slice %31 {offsets = [128, 0], sizes = [32, 128], strides = [1, 1]} : vector<256x128xf32> to vector<32x128xf32>
    %40 = arith.addf %38, %39 : vector<32x128xf32>
    %41 = vector.extract_strided_slice %31 {offsets = [160, 0], sizes = [32, 128], strides = [1, 1]} : vector<256x128xf32> to vector<32x128xf32>
    %42 = arith.addf %40, %41 : vector<32x128xf32>
    %43 = vector.extract_strided_slice %31 {offsets = [192, 0], sizes = [32, 128], strides = [1, 1]} : vector<256x128xf32> to vector<32x128xf32>
    %44 = arith.addf %42, %43 : vector<32x128xf32>
    %45 = vector.extract_strided_slice %31 {offsets = [224, 0], sizes = [32, 128], strides = [1, 1]} : vector<256x128xf32> to vector<32x128xf32>
    %46 = arith.addf %44, %45 : vector<32x128xf32>
    %47 = arith.truncf %46 : vector<32x128xf32> to vector<32x128xbf16>
    %c0_14 = arith.constant 0 : index
    %c0_15 = arith.constant 0 : index
    %48 = vector.load %arg5[%c0_14, %c0_15] : memref<128x128xbf16, #tpu.memory_space<vmem>>, vector<128x128xbf16>
    %cst_16 = arith.constant dense<0.000000e+00> : vector<32x128xf32>
    %49 = tpu.matmul %47, %48, %cst_16 {dimension_numbers = #tpu.dot_dimension_numbers<[1], [0], [0], [1], [0, 0, 1, 1], [], []>} : vector<32x128xbf16>, vector<128x128xbf16>, vector<32x128xf32> -> vector<32x128xf32>
    %c0_17 = arith.constant 0 : index
    %c0_18 = arith.constant 0 : index
    %50 = vector.load %arg6[%c0_17, %c0_18] : memref<1x128xf32, #tpu.memory_space<vmem>>, vector<1x128xf32>
    %51 = vector.broadcast %50 : vector<1x128xf32> to vector<32x128xf32>
    %52 = arith.addf %49, %51 : vector<32x128xf32>
    %53 = arith.addf %52, %0 : vector<32x128xf32>
    %cst_19 = arith.constant dense<0.000000e+00> : vector<32xf32>
    %54 = vector.multi_reduction <add>, %53, %cst_19 [1] : vector<32x128xf32> to vector<32xf32>
    %55 = vector.shape_cast %54 : vector<32xf32> to vector<32x1xf32>
    %cst_20 = arith.constant 1.280000e+02 : f32
    %56 = vector.broadcast %cst_20 : f32 to vector<32x1xf32>
    %57 = arith.divf %55, %56 : vector<32x1xf32>
    %58 = vector.broadcast %57 : vector<32x1xf32> to vector<32x128xf32>
    %59 = arith.subf %53, %58 : vector<32x128xf32>
    %60 = arith.mulf %59, %59 : vector<32x128xf32>
    %cst_21 = arith.constant dense<0.000000e+00> : vector<32xf32>
    %61 = vector.multi_reduction <add>, %60, %cst_21 [1] : vector<32x128xf32> to vector<32xf32>
    %62 = vector.shape_cast %61 : vector<32xf32> to vector<32x1xf32>
    %cst_22 = arith.constant 0.00787401571 : f32
    %63 = vector.broadcast %cst_22 : f32 to vector<32x1xf32>
    %64 = arith.mulf %62, %63 : vector<32x1xf32>
    %65 = vector.broadcast %64 : vector<32x1xf32> to vector<32x128xf32>
    %66 = arith.divf %59, %65 : vector<32x128xf32>
    %67 = arith.truncf %66 : vector<32x128xf32> to vector<32x128xbf16>
    %c0_23 = arith.constant 0 : index
    %c0_24 = arith.constant 0 : index
    %68 = vector.load %arg7[%c0_23, %c0_24] : memref<128x512xbf16, #tpu.memory_space<vmem>>, vector<128x512xbf16>
    %cst_25 = arith.constant dense<0.000000e+00> : vector<32x512xf32>
    %69 = tpu.matmul %67, %68, %cst_25 {dimension_numbers = #tpu.dot_dimension_numbers<[1], [0], [0], [1], [0, 0, 1, 1], [], []>} : vector<32x128xbf16>, vector<128x512xbf16>, vector<32x512xf32> -> vector<32x512xf32>
    %c0_26 = arith.constant 0 : index
    %c0_27 = arith.constant 0 : index
    %70 = vector.load %arg8[%c0_26, %c0_27] : memref<1x512xf32, #tpu.memory_space<vmem>>, vector<1x512xf32>
    %71 = vector.broadcast %70 : vector<1x512xf32> to vector<32x512xf32>
    %72 = arith.addf %69, %71 : vector<32x512xf32>
    %cst_28 = arith.constant 0.000000e+00 : f32
    %73 = vector.broadcast %cst_28 : f32 to vector<32x512xf32>
    %74 = arith.maximumf %72, %73 : vector<32x512xf32>
    %75 = arith.truncf %74 : vector<32x512xf32> to vector<32x512xbf16>
    %c0_29 = arith.constant 0 : index
    %c0_30 = arith.constant 0 : index
    %76 = vector.load %arg9[%c0_29, %c0_30] : memref<512x128xbf16, #tpu.memory_space<vmem>>, vector<512x128xbf16>
    %cst_31 = arith.constant dense<0.000000e+00> : vector<32x128xf32>
    %77 = tpu.matmul %75, %76, %cst_31 {dimension_numbers = #tpu.dot_dimension_numbers<[1], [0], [0], [1], [0, 0, 1, 1], [], []>} : vector<32x512xbf16>, vector<512x128xbf16>, vector<32x128xf32> -> vector<32x128xf32>
    %c0_32 = arith.constant 0 : index
    %c0_33 = arith.constant 0 : index
    %78 = vector.load %arg10[%c0_32, %c0_33] : memref<1x128xf32, #tpu.memory_space<vmem>>, vector<1x128xf32>
    %79 = vector.broadcast %78 : vector<1x128xf32> to vector<32x128xf32>
    %80 = arith.addf %77, %79 : vector<32x128xf32>
    %81 = arith.addf %80, %66 : vector<32x128xf32>
    %cst_34 = arith.constant dense<0.000000e+00> : vector<32xf32>
    %82 = vector.multi_reduction <add>, %81, %cst_34 [1] : vector<32x128xf32> to vector<32xf32>
    %83 = vector.shape_cast %82 : vector<32xf32> to vector<32x1xf32>
    %cst_35 = arith.constant 1.280000e+02 : f32
    %84 = vector.broadcast %cst_35 : f32 to vector<32x1xf32>
    %85 = arith.divf %83, %84 : vector<32x1xf32>
    %86 = vector.broadcast %85 : vector<32x1xf32> to vector<32x128xf32>
    %87 = arith.subf %81, %86 : vector<32x128xf32>
    %88 = arith.mulf %87, %87 : vector<32x128xf32>
    %cst_36 = arith.constant dense<0.000000e+00> : vector<32xf32>
    %89 = vector.multi_reduction <add>, %88, %cst_36 [1] : vector<32x128xf32> to vector<32xf32>
    %90 = vector.shape_cast %89 : vector<32xf32> to vector<32x1xf32>
    %cst_37 = arith.constant 0.00787401571 : f32
    %91 = vector.broadcast %cst_37 : f32 to vector<32x1xf32>
    %92 = arith.mulf %90, %91 : vector<32x1xf32>
    %93 = vector.broadcast %92 : vector<32x1xf32> to vector<32x128xf32>
    %94 = arith.divf %87, %93 : vector<32x128xf32>
    %c0_38 = arith.constant 0 : index
    %c0_39 = arith.constant 0 : index
    %95 = vector.load %arg11[%c0_38, %c0_39] : memref<32x128xf32, #tpu.memory_space<vmem>>, vector<32x128xf32>
    tpu.vector_store %arg11[%c0_38, %c0_39], %94 {strides = array<i32>} : memref<32x128xf32, #tpu.memory_space<vmem>>, vector<32x128xf32>,
    return
  }
  func.func @transform_0(%arg0: i32) -> (i32, i32) {
    %c0_i32 = arith.constant 0 : i32
    %c0_i32_0 = arith.constant 0 : i32
    return %arg0, %c0_i32 : i32, i32
  }
  func.func @transform_1(%arg0: i32) -> (i32, i32) {
    %c0_i32 = arith.constant 0 : i32
    %c0_i32_0 = arith.constant 0 : i32
    %c0_i32_1 = arith.constant 0 : i32
    return %c0_i32, %c0_i32_0 : i32, i32
  }
  func.func @transform_2(%arg0: i32) -> (i32, i32) {
    %c0_i32 = arith.constant 0 : i32
    %c0_i32_0 = arith.constant 0 : i32
    %c0_i32_1 = arith.constant 0 : i32
    return %c0_i32, %c0_i32_0 : i32, i32
  }
  func.func @transform_3(%arg0: i32) -> (i32, i32) {
    %c0_i32 = arith.constant 0 : i32
    %c0_i32_0 = arith.constant 0 : i32
    %c0_i32_1 = arith.constant 0 : i32
    return %c0_i32, %c0_i32_0 : i32, i32
  }
  func.func @transform_4(%arg0: i32) -> (i32, i32) {
    %c0_i32 = arith.constant 0 : i32
    %c0_i32_0 = arith.constant 0 : i32
    %c0_i32_1 = arith.constant 0 : i32
    return %c0_i32, %c0_i32_0 : i32, i32
  }
  func.func @transform_5(%arg0: i32) -> (i32, i32) {
    %c0_i32 = arith.constant 0 : i32
    %c0_i32_0 = arith.constant 0 : i32
    %c0_i32_1 = arith.constant 0 : i32
    return %c0_i32, %c0_i32_0 : i32, i32
  }
  func.func @transform_6(%arg0: i32) -> (i32, i32) {
    %c0_i32 = arith.constant 0 : i32
    %c0_i32_0 = arith.constant 0 : i32
    %c0_i32_1 = arith.constant 0 : i32
    return %c0_i32, %c0_i32_0 : i32, i32
  }
  func.func @transform_7(%arg0: i32) -> (i32, i32) {
    %c0_i32 = arith.constant 0 : i32
    %c0_i32_0 = arith.constant 0 : i32
    %c0_i32_1 = arith.constant 0 : i32
    return %c0_i32, %c0_i32_0 : i32, i32
  }
  func.func @transform_8(%arg0: i32) -> (i32, i32) {
    %c0_i32 = arith.constant 0 : i32
    %c0_i32_0 = arith.constant 0 : i32
    %c0_i32_1 = arith.constant 0 : i32
    return %c0_i32, %c0_i32_0 : i32, i32
  }
  func.func @transform_9(%arg0: i32) -> (i32, i32) {
    %c0_i32 = arith.constant 0 : i32
    %c0_i32_0 = arith.constant 0 : i32
    %c0_i32_1 = arith.constant 0 : i32
    return %c0_i32, %c0_i32_0 : i32, i32
  }
  func.func @transform_10(%arg0: i32) -> (i32, i32) {
    %c0_i32 = arith.constant 0 : i32
    %c0_i32_0 = arith.constant 0 : i32
    return %arg0, %c0_i32 : i32, i32
  }
}

</mosaic_0001>

<llo_original>
// kernel: tile.11
$region0: #{tile.11}
  #allocation0 [shape = 's32[1]{0}', space=sflag, size = 0x4, scoped, tag = 'scoped memory for tile.11']
  %s0 = inlined_call_operand.vmem [shape: f32[16,16], index: 0, kind: input, shape index: {}]
  %s1 = inlined_call_operand.vmem [shape: f32[2,16,2,16], index: 1, kind: output, shape index: {}]
  // Predicated region
  $region2: #{tile.11} parent=0 // pred_check
    _
  $region3: #{tile.11} parent=0 // pred_check_branch
    %3 = sbr.rel (0) target = $region5
  $region4: #{tile.11} parent=0 // pred_region
    _
  $region5: #{tile.11} parent=0 // pred_fallthru
    _
  %v4 = vld [vmem:[%s0] ss:$0 sm:$0xff]
  %5 = vst [vmem:[%s1] sm:$0x3] %v4
  %s6 = scalar_lea.vmem %s1, 32
  %7 = vst [vmem:[%s6] sm:$0x3] %v4
  %s8 = scalar_lea.vmem %s0, 1
  %v9 = vld [vmem:[%s8] ss:$0 sm:$0xff]
  %s10 = scalar_lea.vmem %s1, 2
  %11 = vst [vmem:[%s10] sm:$0x3] %v9
  %s12 = scalar_lea.vmem %s1, 34
  %13 = vst [vmem:[%s12] sm:$0x3] %v9
  %s14 = scalar_lea.vmem %s0, 2
  %v15 = vld [vmem:[%s14] ss:$0 sm:$0xff]
  %s16 = scalar_lea.vmem %s1, 4
  %17 = vst [vmem:[%s16] sm:$0x3] %v15
  %s18 = scalar_lea.vmem %s1, 36
  %19 = vst [vmem:[%s18] sm:$0x3] %v15
  %s20 = scalar_lea.vmem %s0, 3
  %v21 = vld [vmem:[%s20] ss:$0 sm:$0xff]
  %s22 = scalar_lea.vmem %s1, 6
  %23 = vst [vmem:[%s22] sm:$0x3] %v21
  %s24 = scalar_lea.vmem %s1, 38
  %25 = vst [vmem:[%s24] sm:$0x3] %v21
  %s26 = scalar_lea.vmem %s0, 4
  %v27 = vld [vmem:[%s26] ss:$0 sm:$0xff]
  %s28 = scalar_lea.vmem %s1, 8
  %29 = vst [vmem:[%s28] sm:$0x3] %v27
  %s30 = scalar_lea.vmem %s1, 40
  %31 = vst [vmem:[%s30] sm:$0x3] %v27
  %s32 = scalar_lea.vmem %s0, 5
  %v33 = vld [vmem:[%s32] ss:$0 sm:$0xff]
  %s34 = scalar_lea.vmem %s1, 10
  %35 = vst [vmem:[%s34] sm:$0x3] %v33
  %s36 = scalar_lea.vmem %s1, 42
  %37 = vst [vmem:[%s36] sm:$0x3] %v33
  %s38 = scalar_lea.vmem %s0, 6
  %v39 = vld [vmem:[%s38] ss:$0 sm:$0xff]
  %s40 = scalar_lea.vmem %s1, 12
  %41 = vst [vmem:[%s40] sm:$0x3] %v39
  %s42 = scalar_lea.vmem %s1, 44
  %43 = vst [vmem:[%s42] sm:$0x3] %v39
  %s44 = scalar_lea.vmem %s0, 7
  %v45 = vld [vmem:[%s44] ss:$0 sm:$0xff]
  %s46 = scalar_lea.vmem %s1, 14
  %47 = vst [vmem:[%s46] sm:$0x3] %v45
  %s48 = scalar_lea.vmem %s1, 46
  %49 = vst [vmem:[%s48] sm:$0x3] %v45
  %s50 = scalar_lea.vmem %s0, 8
  %v51 = vld [vmem:[%s50] ss:$0 sm:$0xff]
  %s52 = scalar_lea.vmem %s1, 16
  %53 = vst [vmem:[%s52] sm:$0x3] %v51
  %s54 = scalar_lea.vmem %s1, 48
  %55 = vst [vmem:[%s54] sm:$0x3] %v51
  %s56 = scalar_lea.vmem %s0, 8
  %s57 = scalar_lea.vmem %s56, 1
  %v58 = vld [vmem:[%s57] ss:$0 sm:$0xff]
  %s59 = scalar_lea.vmem %s1, 18
  %60 = vst [vmem:[%s59] sm:$0x3] %v58
  %s61 = scalar_lea.vmem %s1, 50
  %62 = vst [vmem:[%s61] sm:$0x3] %v58
  %s63 = scalar_lea.vmem %s0, 8
  %s64 = scalar_lea.vmem %s63, 2
  %v65 = vld [vmem:[%s64] ss:$0 sm:$0xff]
  %s66 = scalar_lea.vmem %s1, 20
  %67 = vst [vmem:[%s66] sm:$0x3] %v65
  %s68 = scalar_lea.vmem %s1, 52
  %69 = vst [vmem:[%s68] sm:$0x3] %v65
  %s70 = scalar_lea.vmem %s0, 8
  %s71 = scalar_lea.vmem %s70, 3
  %v72 = vld [vmem:[%s71] ss:$0 sm:$0xff]
  %s73 = scalar_lea.vmem %s1, 22
  %74 = vst [vmem:[%s73] sm:$0x3] %v72
  %s75 = scalar_lea.vmem %s1, 54
  %76 = vst [vmem:[%s75] sm:$0x3] %v72
  %s77 = scalar_lea.vmem %s0, 8
  %s78 = scalar_lea.vmem %s77, 4
  %v79 = vld [vmem:[%s78] ss:$0 sm:$0xff]
  %s80 = scalar_lea.vmem %s1, 24
  %81 = vst [vmem:[%s80] sm:$0x3] %v79
  %s82 = scalar_lea.vmem %s1, 56
  %83 = vst [vmem:[%s82] sm:$0x3] %v79
  %s84 = scalar_lea.vmem %s0, 8
  %s85 = scalar_lea.vmem %s84, 5
  %v86 = vld [vmem:[%s85] ss:$0 sm:$0xff]
  %s87 = scalar_lea.vmem %s1, 26
  %88 = vst [vmem:[%s87] sm:$0x3] %v86
  %s89 = scalar_lea.vmem %s1, 58
  %90 = vst [vmem:[%s89] sm:$0x3] %v86
  %s91 = scalar_lea.vmem %s0, 8
  %s92 = scalar_lea.vmem %s91, 6
  %v93 = vld [vmem:[%s92] ss:$0 sm:$0xff]
  %s94 = scalar_lea.vmem %s1, 28
  %95 = vst [vmem:[%s94] sm:$0x3] %v93
  %s96 = scalar_lea.vmem %s1, 60
  %97 = vst [vmem:[%s96] sm:$0x3] %v93
  %s98 = scalar_lea.vmem %s0, 8
  %s99 = scalar_lea.vmem %s98, 7
  %v100 = vld [vmem:[%s99] ss:$0 sm:$0xff]
  %s101 = scalar_lea.vmem %s1, 30
  %102 = vst [vmem:[%s101] sm:$0x3] %v100
  %s103 = scalar_lea.vmem %s1, 62
  %104 = vst [vmem:[%s103] sm:$0x3] %v100

// kernel: encoder_transformer_layer.1
$region0: #{encoder_transformer_layer.1}
  #allocation0 [shape = 'u32[]', space=smem, size = 0x4, offset = 0x4, fixed_abs, tag = 'smem constant byte address 0x4 - core index']
  #allocation1 [shape = 'u32[72,128]{1,0:T(1,128)}', space=vmem, size = 0x9000, scoped, tag = 'internal scratch']
  %s0 = inlined_call_operand.vmem [shape: f32[32,128], index: 0, kind: input, shape index: {}]
  %s1 = inlined_call_operand.vmem [shape: bf16[128,384], index: 1, kind: input, shape index: {}]
  %s2 = inlined_call_operand.vmem [shape: f32[256,128], index: 2, kind: input, shape index: {}]
  %s3 = inlined_call_operand.vmem [shape: f32[256,32], index: 3, kind: input, shape index: {}]
  %s4 = inlined_call_operand.vmem [shape: bf16[128,128], index: 4, kind: input, shape index: {}]
  %s5 = inlined_call_operand.vmem [shape: f32[1,128], index: 5, kind: input, shape index: {}]
  %s6 = inlined_call_operand.vmem [shape: bf16[128,512], index: 6, kind: input, shape index: {}]
  %s7 = inlined_call_operand.vmem [shape: f32[1,512], index: 7, kind: input, shape index: {}]
  %s8 = inlined_call_operand.vmem [shape: bf16[512,128], index: 8, kind: input, shape index: {}]
  %s9 = inlined_call_operand.vmem [shape: f32[1,128], index: 9, kind: input, shape index: {}]
  %s10 = inlined_call_operand.hbm [shape: f32[32,128], index: 10, kind: output, shape index: {}]
  %s11 = sld [smem:[#allocation0]]
  $region50: #{encoder_transformer_layer.1} parent=0
    _
  %s13 = ssub.s32 1, %s11
  %s14 = scalar_select 0, %s13, %s11
  $region1: #{encoder_transformer_layer.1} parent=0
    #allocation2 [shape = 'u8[16384]{0}', space=vmem, size = 0x4000, scoped, tag = 'output window, operand 0, single buffered']
    #allocation3 [shape = 's32[1]{0}', space=sflag, size = 0x4, scoped, tag = 'scoped memory for encoder_transformer_layer.1']
    %15 = vsyncpa [#allocation3], 0
    // Predicated region
    $region2: #{encoder_transformer_layer.1} parent=1 // pred_check
      _
    $region3: #{encoder_transformer_layer.1} parent=1 // pred_check_branch
      %17 = sbr.rel (0) target = $region5
    $region4: #{encoder_transformer_layer.1} parent=1 // pred_region
      _
    $region5: #{encoder_transformer_layer.1} parent=1 // pred_fallthru
      _
    // Predicated region
    $region6: #{encoder_transformer_layer.1} parent=1 // pred_check
      _
    $region7: #{encoder_transformer_layer.1} parent=1 // pred_check_branch
      %19 = sbr.rel (0) target = $region9
    $region8: #{encoder_transformer_layer.1} parent=1 // pred_region
      _
    $region9: #{encoder_transformer_layer.1} parent=1 // pred_fallthru
      _
    // Predicated region
    $region10: #{encoder_transformer_layer.1} parent=1 // pred_check
      _
    $region11: #{encoder_transformer_layer.1} parent=1 // pred_check_branch
      %21 = sbr.rel (0) target = $region13
    $region12: #{encoder_transformer_layer.1} parent=1 // pred_region
      _
    $region13: #{encoder_transformer_layer.1} parent=1 // pred_fallthru
      _
    // Predicated region
    $region14: #{encoder_transformer_layer.1} parent=1 // pred_check
      _
    $region15: #{encoder_transformer_layer.1} parent=1 // pred_check_branch
      %23 = sbr.rel (0) target = $region17
    $region16: #{encoder_transformer_layer.1} parent=1 // pred_region
      _
    $region17: #{encoder_transformer_layer.1} parent=1 // pred_fallthru
      _
    // Predicated region
    $region18: #{encoder_transformer_layer.1} parent=1 // pred_check
      _
    $region19: #{encoder_transformer_layer.1} parent=1 // pred_check_branch
      %25 = sbr.rel (0) target = $region21
    $region20: #{encoder_transformer_layer.1} parent=1 // pred_region
      _
    $region21: #{encoder_transformer_layer.1} parent=1 // pred_fallthru
      _
    // Predicated region
    $region22: #{encoder_transformer_layer.1} parent=1 // pred_check
      _
    $region23: #{encoder_transformer_layer.1} parent=1 // pred_check_branch
      %27 = sbr.rel (0) target = $region25
    $region24: #{encoder_transformer_layer.1} parent=1 // pred_region
      _
    $region25: #{encoder_transformer_layer.1} parent=1 // pred_fallthru
      _
    // Predicated region
    $region26: #{encoder_transformer_layer.1} parent=1 // pred_check
      _
    $region27: #{encoder_transformer_layer.1} parent=1 // pred_check_branch
      %29 = sbr.rel (0) target = $region29
    $region28: #{encoder_transformer_layer.1} parent=1 // pred_region
      _
    $region29: #{encoder_transformer_layer.1} parent=1 // pred_fallthru
      _
    // Predicated region
    $region30: #{encoder_transformer_layer.1} parent=1 // pred_check
      _
    $region31: #{encoder_transformer_layer.1} parent=1 // pred_check_branch
      %31 = sbr.rel (0) target = $region33
    $region32: #{encoder_transformer_layer.1} parent=1 // pred_region
      _
    $region33: #{encoder_transformer_layer.1} parent=1 // pred_fallthru
      _
    // Predicated region
    $region34: #{encoder_transformer_layer.1} parent=1 // pred_check
      _
    $region35: #{encoder_transformer_layer.1} parent=1 // pred_check_branch
      %33 = sbr.rel (0) target = $region37
    $region36: #{encoder_transformer_layer.1} parent=1 // pred_region
      _
    $region37: #{encoder_transformer_layer.1} parent=1 // pred_fallthru
      _
    // Predicated region
    $region38: #{encoder_transformer_layer.1} parent=1 // pred_check
      _
    $region39: #{encoder_transformer_layer.1} parent=1 // pred_check_branch
      %35 = sbr.rel (0) target = $region41
    $region40: #{encoder_transformer_layer.1} parent=1 // pred_region
      _
    $region41: #{encoder_transformer_layer.1} parent=1 // pred_fallthru
      _
    %v37 = vld [vmem:[%s0] sm:$0xff]
    %v38 = vld [vmem:[%s0 + $0x8] sm:$0xff]
    %v39 = vld [vmem:[%s0 + $0x10] sm:$0xff]
    %v40 = vld [vmem:[%s0 + $0x18] sm:$0xff]
    %v41 = vpack.c.bf16 %v38, %v37
    %v42 = vpack.c.bf16 %v40, %v39
    %v43 = vld [vmem:[%s1] sm:$0xff]
    %v44 = vld [vmem:[%s1 + $0x8] sm:$0xf]
    %v45 = vld [vmem:[%s1 + $0xc] sm:$0xff]
    %v46 = vld [vmem:[%s1 + $0x14] sm:$0xf]
    %v47 = vld [vmem:[%s1 + $0x18] sm:$0xff]
    %v48 = vld [vmem:[%s1 + $0x20] sm:$0xf]
    %v49 = vld [vmem:[%s1 + $0x24] sm:$0xff]
    %v50 = vld [vmem:[%s1 + $0x2c] sm:$0xf]
    %v51 = vld [vmem:[%s1 + $0x30] sm:$0xff]
    %v52 = vld [vmem:[%s1 + $0x38] sm:$0xf]
    %v53 = vld [vmem:[%s1 + $0x3c] sm:$0xff]
    %v54 = vld [vmem:[%s1 + $0x44] sm:$0xf]
    %v55 = vld [vmem:[%s1 + $0x48] sm:$0xff]
    %v56 = vld [vmem:[%s1 + $0x50] sm:$0xf]
    %v57 = vld [vmem:[%s1 + $0x54] sm:$0xff]
    %v58 = vld [vmem:[%s1 + $0x5c] sm:$0xf]
    %v59 = vld [vmem:[%s1 + $0x60] sm:$0xff]
    %v60 = vld [vmem:[%s1 + $0x68] sm:$0xf]
    %v61 = vld [vmem:[%s1 + $0x6c] sm:$0xff]
    %v62 = vld [vmem:[%s1 + $0x74] sm:$0xf]
    %v63 = vld [vmem:[%s1 + $0x78] sm:$0xff]
    %v64 = vld [vmem:[%s1 + $0x80] sm:$0xf]
    %v65 = vld [vmem:[%s1 + $0x84] sm:$0xff]
    %v66 = vld [vmem:[%s1 + $0x8c] sm:$0xf]
    %v67 = vld [vmem:[%s1 + $0x90] sm:$0xff]
    %v68 = vld [vmem:[%s1 + $0x98] sm:$0xf]
    %v69 = vld [vmem:[%s1 + $0x9c] sm:$0xff]
    %v70 = vld [vmem:[%s1 + $0xa4] sm:$0xf]
    %v71 = vld [vmem:[%s1 + $0xa8] sm:$0xff]
    %v72 = vld [vmem:[%s1 + $0xb0] sm:$0xf]
    %v73 = vld [vmem:[%s1 + $0xb4] sm:$0xff]
    %v74 = vld [vmem:[%s1 + $0xbc] sm:$0xf]
    %v107 = vunpack.c.l.b16 %v43
    %v108 = vunpack.c.h.b16 %v43
    %v109 = vunpack.c.l.b16 %v44
    %v110 = vunpack.c.l.b16 %v45
    %v111 = vunpack.c.h.b16 %v45
    %v112 = vunpack.c.l.b16 %v46
    %v113 = vunpack.c.l.b16 %v47
    %v114 = vunpack.c.h.b16 %v47
    %v115 = vunpack.c.l.b16 %v48
    %v116 = vunpack.c.l.b16 %v49
    %v117 = vunpack.c.h.b16 %v49
    %v118 = vunpack.c.l.b16 %v50
    %v119 = vunpack.c.l.b16 %v51
    %v120 = vunpack.c.h.b16 %v51
    %v121 = vunpack.c.l.b16 %v52
    %v122 = vunpack.c.l.b16 %v53
    %v123 = vunpack.c.h.b16 %v53
    %v124 = vunpack.c.l.b16 %v54
    %v125 = vunpack.c.l.b16 %v55
    %v126 = vunpack.c.h.b16 %v55
    %v127 = vunpack.c.l.b16 %v56
    %v128 = vunpack.c.l.b16 %v57
    %v129 = vunpack.c.h.b16 %v57
    %v130 = vunpack.c.l.b16 %v58
    %v131 = vunpack.c.l.b16 %v59
    %v132 = vunpack.c.h.b16 %v59
    %v133 = vunpack.c.l.b16 %v60
    %v134 = vunpack.c.l.b16 %v61
    %v135 = vunpack.c.h.b16 %v61
    %v136 = vunpack.c.l.b16 %v62
    %v137 = vunpack.c.l.b16 %v63
    %v138 = vunpack.c.h.b16 %v63
    %v139 = vunpack.c.l.b16 %v64
    %v140 = vunpack.c.l.b16 %v65
    %v141 = vunpack.c.h.b16 %v65
    %v142 = vunpack.c.l.b16 %v66
    %v143 = vunpack.c.l.b16 %v67
    %v144 = vunpack.c.h.b16 %v67
    %v145 = vunpack.c.l.b16 %v68
    %v146 = vunpack.c.l.b16 %v69
    %v147 = vunpack.c.h.b16 %v69
    %v148 = vunpack.c.l.b16 %v70
    %v149 = vunpack.c.l.b16 %v71
    %v150 = vunpack.c.h.b16 %v71
    %v151 = vunpack.c.l.b16 %v72
    %v152 = vunpack.c.l.b16 %v73
    %v153 = vunpack.c.h.b16 %v73
    %v154 = vunpack.c.l.b16 %v74
    %v155 = vpack.c.b16 %v110, %v107
    %v156 = vpack.c.b16 %v111, %v108
    %v157 = vpack.c.b16 %v112, %v109
    %v158 = vpack.c.b16 %v116, %v113
    %v159 = vpack.c.b16 %v117, %v114
    %v160 = vpack.c.b16 %v118, %v115
    %v161 = vpack.c.b16 %v122, %v119
    %v162 = vpack.c.b16 %v123, %v120
    %v163 = vpack.c.b16 %v124, %v121
    %v164 = vpack.c.b16 %v128, %v125
    %v165 = vpack.c.b16 %v129, %v126
    %v166 = vpack.c.b16 %v130, %v127
    %v167 = vpack.c.b16 %v134, %v131
    %v168 = vpack.c.b16 %v135, %v132
    %v169 = vpack.c.b16 %v136, %v133
    %v170 = vpack.c.b16 %v140, %v137
    %v171 = vpack.c.b16 %v141, %v138
    %v172 = vpack.c.b16 %v142, %v139
    %v173 = vpack.c.b16 %v146, %v143
    %v174 = vpack.c.b16 %v147, %v144
    %v175 = vpack.c.b16 %v148, %v145
    %v176 = vpack.c.b16 %v152, %v149
    %v177 = vpack.c.b16 %v153, %v150
    %v178 = vpack.c.b16 %v154, %v151
    %203 = vmatpush.bf16.msra.mxu0 %v176
    %204 = vmatpush.bf16.msra.mxu0 %v173
    %205 = vmatpush.bf16.msra.mxu0 %v170
    %206 = vmatpush.bf16.msra.mxu0 %v167
    %207 = vmatpush.bf16.msra.mxu0 %v164
    %208 = vmatpush.bf16.msra.mxu0 %v161
    %209 = vmatpush.bf16.msra.mxu0 %v158
    %210 = vmatpush.bf16.msra.mxu0 %v155
    %211 = vmatmul.bf16.gmra.mxu0 %v41
    %v212 = vpop.f32.mrf.mxu0
    %v213 = vadd.f32 0.0, %v212
    %v214 = vpop.f32.mrf.mxu0
    %v215 = vadd.f32 0.0, %v214
    %216 = vmatmul.bf16.gmra.mxu0 %v42
    %v217 = vpop.f32.mrf.mxu0
    %v218 = vadd.f32 0.0, %v217
    %v219 = vpop.f32.mrf.mxu0
    %v220 = vadd.f32 0.0, %v219
    %221 = vdwg.mxu0
    %222 = vmatpush.bf16.msra.mxu0 %v177
    %223 = vmatpush.bf16.msra.mxu0 %v174
    %224 = vmatpush.bf16.msra.mxu0 %v171
    %225 = vmatpush.bf16.msra.mxu0 %v168
    %226 = vmatpush.bf16.msra.mxu0 %v165
    %227 = vmatpush.bf16.msra.mxu0 %v162
    %228 = vmatpush.bf16.msra.mxu0 %v159
    %229 = vmatpush.bf16.msra.mxu0 %v156
    %230 = vmatmul.bf16.gmra.mxu0 %v41
    %v231 = vpop.f32.mrf.mxu0
    %v232 = vadd.f32 0.0, %v231
    %v233 = vpop.f32.mrf.mxu0
    %v234 = vadd.f32 0.0, %v233
    %235 = vmatmul.bf16.gmra.mxu0 %v42
    %v236 = vpop.f32.mrf.mxu0
    %v237 = vadd.f32 0.0, %v236
    %v238 = vpop.f32.mrf.mxu0
    %v239 = vadd.f32 0.0, %v238
    %240 = vdwg.mxu0
    %241 = vmatpush.bf16.msra.mxu0 %v178
    %242 = vmatpush.bf16.msra.mxu0 %v175
    %243 = vmatpush.bf16.msra.mxu0 %v172
    %244 = vmatpush.bf16.msra.mxu0 %v169
    %245 = vmatpush.bf16.msra.mxu0 %v166
    %246 = vmatpush.bf16.msra.mxu0 %v163
    %247 = vmatpush.bf16.msra.mxu0 %v160
    %248 = vmatpush.bf16.msra.mxu0 %v157
    %249 = vmatmul.bf16.gmra.mxu0 %v41
    %v250 = vpop.f32.mrf.mxu0
    %v251 = vadd.f32 0.0, %v250
    %v252 = vpop.f32.mrf.mxu0
    %v253 = vadd.f32 0.0, %v252
    %254 = vmatmul.bf16.gmra.mxu0 %v42
    %v255 = vpop.f32.mrf.mxu0
    %v256 = vadd.f32 0.0, %v255
    %v257 = vpop.f32.mrf.mxu0
    %v258 = vadd.f32 0.0, %v257
    %259 = vdwg.mxu0
    %v260 = vpack.c.bf16 %v234, %v232
    %v261 = vpack.c.bf16 %v239, %v237
    %v262 = vpack.c.bf16 %v253, %v251
    %v263 = vpack.c.bf16 %v258, %v256
    %v264 = vld [vmem:[%s2] sm:$0xff]
    %v265 = vld [vmem:[%s2 + $0x8] sm:$0xff]
    %v266 = vld [vmem:[%s2 + $0x10] sm:$0xff]
    %v267 = vld [vmem:[%s2 + $0x18] sm:$0xff]
    %v268 = vld [vmem:[%s2 + $0x20] sm:$0xff]
    %v269 = vld [vmem:[%s2 + $0x28] sm:$0xff]
    %v270 = vld [vmem:[%s2 + $0x30] sm:$0xff]
    %v271 = vld [vmem:[%s2 + $0x38] sm:$0xff]
    %v272 = vld [vmem:[%s2 + $0x40] sm:$0xff]
    %v273 = vld [vmem:[%s2 + $0x48] sm:$0xff]
    %v274 = vld [vmem:[%s2 + $0x50] sm:$0xff]
    %v275 = vld [vmem:[%s2 + $0x58] sm:$0xff]
    %v276 = vld [vmem:[%s2 + $0x60] sm:$0xff]
    %v277 = vld [vmem:[%s2 + $0x68] sm:$0xff]
    %v278 = vld [vmem:[%s2 + $0x70] sm:$0xff]
    %v279 = vld [vmem:[%s2 + $0x78] sm:$0xff]
    %v280 = vld [vmem:[%s2 + $0x80] sm:$0xff]
    %v281 = vld [vmem:[%s2 + $0x88] sm:$0xff]
    %v282 = vld [vmem:[%s2 + $0x90] sm:$0xff]
    %v283 = vld [vmem:[%s2 + $0x98] sm:$0xff]
    %v284 = vld [vmem:[%s2 + $0xa0] sm:$0xff]
    %v285 = vld [vmem:[%s2 + $0xa8] sm:$0xff]
    %v286 = vld [vmem:[%s2 + $0xb0] sm:$0xff]
    %v287 = vld [vmem:[%s2 + $0xb8] sm:$0xff]
    %v288 = vld [vmem:[%s2 + $0xc0] sm:$0xff]
    %v289 = vld [vmem:[%s2 + $0xc8] sm:$0xff]
    %v290 = vld [vmem:[%s2 + $0xd0] sm:$0xff]
    %v291 = vld [vmem:[%s2 + $0xd8] sm:$0xff]
    %v292 = vld [vmem:[%s2 + $0xe0] sm:$0xff]
    %v293 = vld [vmem:[%s2 + $0xe8] sm:$0xff]
    %v294 = vld [vmem:[%s2 + $0xf0] sm:$0xff]
    %v295 = vld [vmem:[%s2 + $0xf8] sm:$0xff]
    %v296 = vmul.f32 %v213, %v264
    %v297 = vmul.f32 %v215, %v265
    %v298 = vmul.f32 %v218, %v266
    %v299 = vmul.f32 %v220, %v267
    %v300 = vmul.f32 %v213, %v268
    %v301 = vmul.f32 %v215, %v269
    %v302 = vmul.f32 %v218, %v270
    %v303 = vmul.f32 %v220, %v271
    %v304 = vmul.f32 %v213, %v272
    %v305 = vmul.f32 %v215, %v273
    %v306 = vmul.f32 %v218, %v274
    %v307 = vmul.f32 %v220, %v275
    %v308 = vmul.f32 %v213, %v276
    %v309 = vmul.f32 %v215, %v277
    %v310 = vmul.f32 %v218, %v278
    %v311 = vmul.f32 %v220, %v279
    %v312 = vmul.f32 %v213, %v280
    %v313 = vmul.f32 %v215, %v281
    %v314 = vmul.f32 %v218, %v282
    %v315 = vmul.f32 %v220, %v283
    %v316 = vmul.f32 %v213, %v284
    %v317 = vmul.f32 %v215, %v285
    %v318 = vmul.f32 %v218, %v286
    %v319 = vmul.f32 %v220, %v287
    %v320 = vmul.f32 %v213, %v288
    %v321 = vmul.f32 %v215, %v289
    %v322 = vmul.f32 %v218, %v290
    %v323 = vmul.f32 %v220, %v291
    %v324 = vmul.f32 %v213, %v292
    %v325 = vmul.f32 %v215, %v293
    %v326 = vmul.f32 %v218, %v294
    %v327 = vmul.f32 %v220, %v295
    %v328 = vpack.c.bf16 %v297, %v296
    %v329 = vpack.c.bf16 %v299, %v298
    %v330 = vpack.c.bf16 %v301, %v300
    %v331 = vpack.c.bf16 %v303, %v302
    %v332 = vpack.c.bf16 %v305, %v304
    %v333 = vpack.c.bf16 %v307, %v306
    %v334 = vpack.c.bf16 %v309, %v308
    %v335 = vpack.c.bf16 %v311, %v310
    %v336 = vpack.c.bf16 %v313, %v312
    %v337 = vpack.c.bf16 %v315, %v314
    %v338 = vpack.c.bf16 %v317, %v316
    %v339 = vpack.c.bf16 %v319, %v318
    %v340 = vpack.c.bf16 %v321, %v320
    %v341 = vpack.c.bf16 %v323, %v322
    %v342 = vpack.c.bf16 %v325, %v324
    %v343 = vpack.c.bf16 %v327, %v326
    %344 = vmatpush.bf16.xpose.msra.mxu0 0
    %345 = vmatpush.bf16.xpose.msra.mxu0 0
    %346 = vmatpush.bf16.xpose.msra.mxu0 0
    %347 = vmatpush.bf16.xpose.msra.mxu0 0
    %348 = vmatpush.bf16.xpose.msra.mxu0 0
    %349 = vmatpush.bf16.xpose.msra.mxu0 0
    %350 = vmatpush.bf16.xpose.msra.mxu0 %v261
    %351 = vmatpush.bf16.xpose.msra.mxu0 %v260
    %352 = vmatmul.bf16.gmra.mxu0 %v328
    %v353 = vpop.f32.mrf.mxu0
    %v354 = vadd.f32 0.0, %v353
    %v355 = vpop.f32.mrf.mxu0
    %v356 = vadd.f32 0.0, %v355
    %357 = vmatmul.bf16.gmra.mxu0 %v329
    %v358 = vpop.f32.mrf.mxu0
    %v359 = vadd.f32 0.0, %v358
    %v360 = vpop.f32.mrf.mxu0
    %v361 = vadd.f32 0.0, %v360
    %362 = vmatmul.bf16.gmra.mxu0 %v330
    %v363 = vpop.f32.mrf.mxu0
    %v364 = vadd.f32 0.0, %v363
    %v365 = vpop.f32.mrf.mxu0
    %v366 = vadd.f32 0.0, %v365
    %367 = vmatmul.bf16.gmra.mxu0 %v331
    %v368 = vpop.f32.mrf.mxu0
    %v369 = vadd.f32 0.0, %v368
    %v370 = vpop.f32.mrf.mxu0
    %v371 = vadd.f32 0.0, %v370
    %372 = vmatmul.bf16.gmra.mxu0 %v332
    %v373 = vpop.f32.mrf.mxu0
    %v374 = vadd.f32 0.0, %v373
    %v375 = vpop.f32.mrf.mxu0
    %v376 = vadd.f32 0.0, %v375
    %377 = vmatmul.bf16.gmra.mxu0 %v333
    %v378 = vpop.f32.mrf.mxu0
    %v379 = vadd.f32 0.0, %v378
    %v380 = vpop.f32.mrf.mxu0
    %v381 = vadd.f32 0.0, %v380
    %382 = vmatmul.bf16.gmra.mxu0 %v334
    %v383 = vpop.f32.mrf.mxu0
    %v384 = vadd.f32 0.0, %v383
    %v385 = vpop.f32.mrf.mxu0
    %v386 = vadd.f32 0.0, %v385
    %387 = vmatmul.bf16.gmra.mxu0 %v335
    %v388 = vpop.f32.mrf.mxu0
    %v389 = vadd.f32 0.0, %v388
    %v390 = vpop.f32.mrf.mxu0
    %v391 = vadd.f32 0.0, %v390
    %392 = vmatmul.bf16.gmra.mxu0 %v336
    %v393 = vpop.f32.mrf.mxu0
    %v394 = vadd.f32 0.0, %v393
    %v395 = vpop.f32.mrf.mxu0
    %v396 = vadd.f32 0.0, %v395
    %397 = vmatmul.bf16.gmra.mxu0 %v337
    %v398 = vpop.f32.mrf.mxu0
    %v399 = vadd.f32 0.0, %v398
    %v400 = vpop.f32.mrf.mxu0
    %v401 = vadd.f32 0.0, %v400
    %402 = vmatmul.bf16.gmra.mxu0 %v338
    %v403 = vpop.f32.mrf.mxu0
    %v404 = vadd.f32 0.0, %v403
    %v405 = vpop.f32.mrf.mxu0
    %v406 = vadd.f32 0.0, %v405
    %407 = vmatmul.bf16.gmra.mxu0 %v339
    %v408 = vpop.f32.mrf.mxu0
    %v409 = vadd.f32 0.0, %v408
    %v410 = vpop.f32.mrf.mxu0
    %v411 = vadd.f32 0.0, %v410
    %412 = vmatmul.bf16.gmra.mxu0 %v340
    %v413 = vpop.f32.mrf.mxu0
    %v414 = vadd.f32 0.0, %v413
    %v415 = vpop.f32.mrf.mxu0
    %v416 = vadd.f32 0.0, %v415
    %417 = vmatmul.bf16.gmra.mxu0 %v341
    %v418 = vpop.f32.mrf.mxu0
    %v419 = vadd.f32 0.0, %v418
    %v420 = vpop.f32.mrf.mxu0
    %v421 = vadd.f32 0.0, %v420
    %422 = vmatmul.bf16.gmra.mxu0 %v342
    %v423 = vpop.f32.mrf.mxu0
    %v424 = vadd.f32 0.0, %v423
    %v425 = vpop.f32.mrf.mxu0
    %v426 = vadd.f32 0.0, %v425
    %427 = vmatmul.bf16.gmra.mxu0 %v343
    %v428 = vpop.f32.mrf.mxu0
    %v429 = vadd.f32 0.0, %v428
    %v430 = vpop.f32.mrf.mxu0
    %v431 = vadd.f32 0.0, %v430
    %432 = vdwg.mxu0
    %v433 = vmul.f32 %v354, 0.25
    %v434 = vmul.f32 %v356, 0.25
    %v435 = vmul.f32 %v359, 0.25
    %v436 = vmul.f32 %v361, 0.25
    %v437 = vmul.f32 %v364, 0.25
    %v438 = vmul.f32 %v366, 0.25
    %v439 = vmul.f32 %v369, 0.25
    %v440 = vmul.f32 %v371, 0.25
    %v441 = vmul.f32 %v374, 0.25
    %v442 = vmul.f32 %v376, 0.25
    %v443 = vmul.f32 %v379, 0.25
    %v444 = vmul.f32 %v381, 0.25
    %v445 = vmul.f32 %v384, 0.25
    %v446 = vmul.f32 %v386, 0.25
    %v447 = vmul.f32 %v389, 0.25
    %v448 = vmul.f32 %v391, 0.25
    %v449 = vmul.f32 %v394, 0.25
    %v450 = vmul.f32 %v396, 0.25
    %v451 = vmul.f32 %v399, 0.25
    %v452 = vmul.f32 %v401, 0.25
    %v453 = vmul.f32 %v404, 0.25
    %v454 = vmul.f32 %v406, 0.25
    %v455 = vmul.f32 %v409, 0.25
    %v456 = vmul.f32 %v411, 0.25
    %v457 = vmul.f32 %v414, 0.25
    %v458 = vmul.f32 %v416, 0.25
    %v459 = vmul.f32 %v419, 0.25
    %v460 = vmul.f32 %v421, 0.25
    %v461 = vmul.f32 %v424, 0.25
    %v462 = vmul.f32 %v426, 0.25
    %v463 = vmul.f32 %v429, 0.25
    %v464 = vmul.f32 %v431, 0.25
    %v465 = vld [vmem:[%s3] sm:$0xff]
    %v466 = vld [vmem:[%s3 + $0x8] sm:$0xff]
    %v467 = vld [vmem:[%s3 + $0x10] sm:$0xff]
    %v468 = vld [vmem:[%s3 + $0x18] sm:$0xff]
    %v469 = vld [vmem:[%s3 + $0x20] sm:$0xff]
    %v470 = vld [vmem:[%s3 + $0x28] sm:$0xff]
    %v471 = vld [vmem:[%s3 + $0x30] sm:$0xff]
    %v472 = vld [vmem:[%s3 + $0x38] sm:$0xff]
    %v473 = vld [vmem:[%s3 + $0x40] sm:$0xff]
    %v474 = vld [vmem:[%s3 + $0x48] sm:$0xff]
    %v475 = vld [vmem:[%s3 + $0x50] sm:$0xff]
    %v476 = vld [vmem:[%s3 + $0x58] sm:$0xff]
    %v477 = vld [vmem:[%s3 + $0x60] sm:$0xff]
    %v478 = vld [vmem:[%s3 + $0x68] sm:$0xff]
    %v479 = vld [vmem:[%s3 + $0x70] sm:$0xff]
    %v480 = vld [vmem:[%s3 + $0x78] sm:$0xff]
    %v481 = vld [vmem:[%s3 + $0x80] sm:$0xff]
    %v482 = vld [vmem:[%s3 + $0x88] sm:$0xff]
    %v483 = vld [vmem:[%s3 + $0x90] sm:$0xff]
    %v484 = vld [vmem:[%s3 + $0x98] sm:$0xff]
    %v485 = vld [vmem:[%s3 + $0xa0] sm:$0xff]
    %v486 = vld [vmem:[%s3 + $0xa8] sm:$0xff]
    %v487 = vld [vmem:[%s3 + $0xb0] sm:$0xff]
    %v488 = vld [vmem:[%s3 + $0xb8] sm:$0xff]
    %v489 = vld [vmem:[%s3 + $0xc0] sm:$0xff]
    %v490 = vld [vmem:[%s3 + $0xc8] sm:$0xff]
    %v491 = vld [vmem:[%s3 + $0xd0] sm:$0xff]
    %v492 = vld [vmem:[%s3 + $0xd8] sm:$0xff]
    %v493 = vld [vmem:[%s3 + $0xe0] sm:$0xff]
    %v494 = vld [vmem:[%s3 + $0xe8] sm:$0xff]
    %v495 = vld [vmem:[%s3 + $0xf0] sm:$0xff]
    %v496 = vld [vmem:[%s3 + $0xf8] sm:$0xff]
    %v497 = vadd.f32 %v433, %v465
    %v498 = vadd.f32 %v434, %v466
    %v499 = vadd.f32 %v435, %v467
    %v500 = vadd.f32 %v436, %v468
    %v501 = vadd.f32 %v437, %v469
    %v502 = vadd.f32 %v438, %v470
    %v503 = vadd.f32 %v439, %v471
    %v504 = vadd.f32 %v440, %v472
    %v505 = vadd.f32 %v441, %v473
    %v506 = vadd.f32 %v442, %v474
    %v507 = vadd.f32 %v443, %v475
    %v508 = vadd.f32 %v444, %v476
    %v509 = vadd.f32 %v445, %v477
    %v510 = vadd.f32 %v446, %v478
    %v511 = vadd.f32 %v447, %v479
    %v512 = vadd.f32 %v448, %v480
    %v513 = vadd.f32 %v449, %v481
    %v514 = vadd.f32 %v450, %v482
    %v515 = vadd.f32 %v451, %v483
    %v516 = vadd.f32 %v452, %v484
    %v517 = vadd.f32 %v453, %v485
    %v518 = vadd.f32 %v454, %v486
    %v519 = vadd.f32 %v455, %v487
    %v520 = vadd.f32 %v456, %v488
    %v521 = vadd.f32 %v457, %v489
    %v522 = vadd.f32 %v458, %v490
    %v523 = vadd.f32 %v459, %v491
    %v524 = vadd.f32 %v460, %v492
    %v525 = vadd.f32 %v461, %v493
    %v526 = vadd.f32 %v462, %v494
    %v527 = vadd.f32 %v463, %v495
    %v528 = vadd.f32 %v464, %v496
    %vm529 = vcmask 261120
    %v530 = vsel %vm529, %v497, -inf
    %531 = vmax.xlane.f32.xlu0 %v530
    %v532 = vpop.xlane.xlu0 %531
    %v533 = vsel %vm529, %v498, -inf
    %534 = vmax.xlane.f32.xlu0 %v533
    %v535 = vpop.xlane.xlu0 %534
    %v536 = vsel %vm529, %v499, -inf
    %537 = vmax.xlane.f32.xlu0 %v536
    %v538 = vpop.xlane.xlu0 %537
    %v539 = vsel %vm529, %v500, -inf
    %540 = vmax.xlane.f32.xlu0 %v539
    %v541 = vpop.xlane.xlu0 %540
    %v542 = vsel %vm529, %v501, -inf
    %543 = vmax.xlane.f32.xlu0 %v542
    %v544 = vpop.xlane.xlu0 %543
    %v545 = vsel %vm529, %v502, -inf
    %546 = vmax.xlane.f32.xlu0 %v545
    %v547 = vpop.xlane.xlu0 %546
    %v548 = vsel %vm529, %v503, -inf
    %549 = vmax.xlane.f32.xlu0 %v548
    %v550 = vpop.xlane.xlu0 %549
    %v551 = vsel %vm529, %v504, -inf
    %552 = vmax.xlane.f32.xlu0 %v551
    %v553 = vpop.xlane.xlu0 %552
    %v554 = vsel %vm529, %v505, -inf
    %555 = vmax.xlane.f32.xlu0 %v554
    %v556 = vpop.xlane.xlu0 %555
    %v557 = vsel %vm529, %v506, -inf
    %558 = vmax.xlane.f32.xlu0 %v557
    %v559 = vpop.xlane.xlu0 %558
    %v560 = vsel %vm529, %v507, -inf
    %561 = vmax.xlane.f32.xlu0 %v560
    %v562 = vpop.xlane.xlu0 %561
    %v563 = vsel %vm529, %v508, -inf
    %564 = vmax.xlane.f32.xlu0 %v563
    %v565 = vpop.xlane.xlu0 %564
    %v566 = vsel %vm529, %v509, -inf
    %567 = vmax.xlane.f32.xlu0 %v566
    %v568 = vpop.xlane.xlu0 %567
    %v569 = vsel %vm529, %v510, -inf
    %570 = vmax.xlane.f32.xlu0 %v569
    %v571 = vpop.xlane.xlu0 %570
    %v572 = vsel %vm529, %v511, -inf
    %573 = vmax.xlane.f32.xlu0 %v572
    %v574 = vpop.xlane.xlu0 %573
    %v575 = vsel %vm529, %v512, -inf
    %576 = vmax.xlane.f32.xlu0 %v575
    %v577 = vpop.xlane.xlu0 %576
    %v578 = vsel %vm529, %v513, -inf
    %579 = vmax.xlane.f32.xlu0 %v578
    %v580 = vpop.xlane.xlu0 %579
    %v581 = vsel %vm529, %v514, -inf
    %582 = vmax.xlane.f32.xlu0 %v581
    %v583 = vpop.xlane.xlu0 %582
    %v584 = vsel %vm529, %v515, -inf
    %585 = vmax.xlane.f32.xlu0 %v584
    %v586 = vpop.xlane.xlu0 %585
    %v587 = vsel %vm529, %v516, -inf
    %588 = vmax.xlane.f32.xlu0 %v587
    %v589 = vpop.xlane.xlu0 %588
    %v590 = vsel %vm529, %v517, -inf
    %591 = vmax.xlane.f32.xlu0 %v590
    %v592 = vpop.xlane.xlu0 %591
    %v593 = vsel %vm529, %v518, -inf
    %594 = vmax.xlane.f32.xlu0 %v593
    %v595 = vpop.xlane.xlu0 %594
    %v596 = vsel %vm529, %v519, -inf
    %597 = vmax.xlane.f32.xlu0 %v596
    %v598 = vpop.xlane.xlu0 %597
    %v599 = vsel %vm529, %v520, -inf
    %600 = vmax.xlane.f32.xlu0 %v599
    %v601 = vpop.xlane.xlu0 %600
    %v602 = vsel %vm529, %v521, -inf
    %603 = vmax.xlane.f32.xlu0 %v602
    %v604 = vpop.xlane.xlu0 %603
    %v605 = vsel %vm529, %v522, -inf
    %606 = vmax.xlane.f32.xlu0 %v605
    %v607 = vpop.xlane.xlu0 %606
    %v608 = vsel %vm529, %v523, -inf
    %609 = vmax.xlane.f32.xlu0 %v608
    %v610 = vpop.xlane.xlu0 %609
    %v611 = vsel %vm529, %v524, -inf
    %612 = vmax.xlane.f32.xlu0 %v611
    %v613 = vpop.xlane.xlu0 %612
    %v614 = vsel %vm529, %v525, -inf
    %615 = vmax.xlane.f32.xlu0 %v614
    %v616 = vpop.xlane.xlu0 %615
    %v617 = vsel %vm529, %v526, -inf
    %618 = vmax.xlane.f32.xlu0 %v617
    %v619 = vpop.xlane.xlu0 %618
    %v620 = vsel %vm529, %v527, -inf
    %621 = vmax.xlane.f32.xlu0 %v620
    %v622 = vpop.xlane.xlu0 %621
    %v623 = vsel %vm529, %v528, -inf
    %624 = vmax.xlane.f32.xlu0 %v623
    %v625 = vpop.xlane.xlu0 %624
    %v626 = vsub.f32 %v497, %v532
    %v627 = vsub.f32 %v498, %v535
    %v628 = vsub.f32 %v499, %v538
    %v629 = vsub.f32 %v500, %v541
    %v630 = vsub.f32 %v501, %v544
    %v631 = vsub.f32 %v502, %v547
    %v632 = vsub.f32 %v503, %v550
    %v633 = vsub.f32 %v504, %v553
    %v634 = vsub.f32 %v505, %v556
    %v635 = vsub.f32 %v506, %v559
    %v636 = vsub.f32 %v507, %v562
    %v637 = vsub.f32 %v508, %v565
    %v638 = vsub.f32 %v509, %v568
    %v639 = vsub.f32 %v510, %v571
    %v640 = vsub.f32 %v511, %v574
    %v641 = vsub.f32 %v512, %v577
    %v642 = vsub.f32 %v513, %v580
    %v643 = vsub.f32 %v514, %v583
    %v644 = vsub.f32 %v515, %v586
    %v645 = vsub.f32 %v516, %v589
    %v646 = vsub.f32 %v517, %v592
    %v647 = vsub.f32 %v518, %v595
    %v648 = vsub.f32 %v519, %v598
    %v649 = vsub.f32 %v520, %v601
    %v650 = vsub.f32 %v521, %v604
    %v651 = vsub.f32 %v522, %v607
    %v652 = vsub.f32 %v523, %v610
    %v653 = vsub.f32 %v524, %v613
    %v654 = vsub.f32 %v525, %v616
    %v655 = vsub.f32 %v526, %v619
    %v656 = vsub.f32 %v527, %v622
    %v657 = vsub.f32 %v528, %v625
    %v658 = vmul.f32 %v626, 1.442695
    %v659 = vpow.pop %v658
    %v660 = vmul.f32 %v627, 1.442695
    %v661 = vpow.pop %v660
    %v662 = vmul.f32 %v628, 1.442695
    %v663 = vpow.pop %v662
    %v664 = vmul.f32 %v629, 1.442695
    %v665 = vpow.pop %v664
    %v666 = vmul.f32 %v630, 1.442695
    %v667 = vpow.pop %v666
    %v668 = vmul.f32 %v631, 1.442695
    %v669 = vpow.pop %v668
    %v670 = vmul.f32 %v632, 1.442695
    %v671 = vpow.pop %v670
    %v672 = vmul.f32 %v633, 1.442695
    %v673 = vpow.pop %v672
    %v674 = vmul.f32 %v634, 1.442695
    %v675 = vpow.pop %v674
    %v676 = vmul.f32 %v635, 1.442695
    %v677 = vpow.pop %v676
    %v678 = vmul.f32 %v636, 1.442695
    %v679 = vpow.pop %v678
    %v680 = vmul.f32 %v637, 1.442695
    %v681 = vpow.pop %v680
    %v682 = vmul.f32 %v638, 1.442695
    %v683 = vpow.pop %v682
    %v684 = vmul.f32 %v639, 1.442695
    %v685 = vpow.pop %v684
    %v686 = vmul.f32 %v640, 1.442695
    %v687 = vpow.pop %v686
    %v688 = vmul.f32 %v641, 1.442695
    %v689 = vpow.pop %v688
    %v690 = vmul.f32 %v642, 1.442695
    %v691 = vpow.pop %v690
    %v692 = vmul.f32 %v643, 1.442695
    %v693 = vpow.pop %v692
    %v694 = vmul.f32 %v644, 1.442695
    %v695 = vpow.pop %v694
    %v696 = vmul.f32 %v645, 1.442695
    %v697 = vpow.pop %v696
    %v698 = vmul.f32 %v646, 1.442695
    %v699 = vpow.pop %v698
    %v700 = vmul.f32 %v647, 1.442695
    %v701 = vpow.pop %v700
    %v702 = vmul.f32 %v648, 1.442695
    %v703 = vpow.pop %v702
    %v704 = vmul.f32 %v649, 1.442695
    %v705 = vpow.pop %v704
    %v706 = vmul.f32 %v650, 1.442695
    %v707 = vpow.pop %v706
    %v708 = vmul.f32 %v651, 1.442695
    %v709 = vpow.pop %v708
    %v710 = vmul.f32 %v652, 1.442695
    %v711 = vpow.pop %v710
    %v712 = vmul.f32 %v653, 1.442695
    %v713 = vpow.pop %v712
    %v714 = vmul.f32 %v654, 1.442695
    %v715 = vpow.pop %v714
    %v716 = vmul.f32 %v655, 1.442695
    %v717 = vpow.pop %v716
    %v718 = vmul.f32 %v656, 1.442695
    %v719 = vpow.pop %v718
    %v720 = vmul.f32 %v657, 1.442695
    %v721 = vpow.pop %v720
    %v722 = vsel %vm529, %v659, 0.0
    %723 = vadd.xlane.f32.xlu0 %v722
    %v724 = vpop.xlane.xlu0 %723
    %v725 = vsel %vm529, %v661, 0.0
    %726 = vadd.xlane.f32.xlu0 %v725
    %v727 = vpop.xlane.xlu0 %726
    %v728 = vsel %vm529, %v663, 0.0
    %729 = vadd.xlane.f32.xlu0 %v728
    %v730 = vpop.xlane.xlu0 %729
    %v731 = vsel %vm529, %v665, 0.0
    %732 = vadd.xlane.f32.xlu0 %v731
    %v733 = vpop.xlane.xlu0 %732
    %v734 = vsel %vm529, %v667, 0.0
    %735 = vadd.xlane.f32.xlu0 %v734
    %v736 = vpop.xlane.xlu0 %735
    %v737 = vsel %vm529, %v669, 0.0
    %738 = vadd.xlane.f32.xlu0 %v737
    %v739 = vpop.xlane.xlu0 %738
    %v740 = vsel %vm529, %v671, 0.0
    %741 = vadd.xlane.f32.xlu0 %v740
    %v742 = vpop.xlane.xlu0 %741
    %v743 = vsel %vm529, %v673, 0.0
    %744 = vadd.xlane.f32.xlu0 %v743
    %v745 = vpop.xlane.xlu0 %744
    %v746 = vsel %vm529, %v675, 0.0
    %747 = vadd.xlane.f32.xlu0 %v746
    %v748 = vpop.xlane.xlu0 %747
    %v749 = vsel %vm529, %v677, 0.0
    %750 = vadd.xlane.f32.xlu0 %v749
    %v751 = vpop.xlane.xlu0 %750
    %v752 = vsel %vm529, %v679, 0.0
    %753 = vadd.xlane.f32.xlu0 %v752
    %v754 = vpop.xlane.xlu0 %753
    %v755 = vsel %vm529, %v681, 0.0
    %756 = vadd.xlane.f32.xlu0 %v755
    %v757 = vpop.xlane.xlu0 %756
    %v758 = vsel %vm529, %v683, 0.0
    %759 = vadd.xlane.f32.xlu0 %v758
    %v760 = vpop.xlane.xlu0 %759
    %v761 = vsel %vm529, %v685, 0.0
    %762 = vadd.xlane.f32.xlu0 %v761
    %v763 = vpop.xlane.xlu0 %762
    %v764 = vsel %vm529, %v687, 0.0
    %765 = vadd.xlane.f32.xlu0 %v764
    %v766 = vpop.xlane.xlu0 %765
    %v767 = vsel %vm529, %v689, 0.0
    %768 = vadd.xlane.f32.xlu0 %v767
    %v769 = vpop.xlane.xlu0 %768
    %v770 = vsel %vm529, %v691, 0.0
    %771 = vadd.xlane.f32.xlu0 %v770
    %v772 = vpop.xlane.xlu0 %771
    %v773 = vsel %vm529, %v693, 0.0
    %774 = vadd.xlane.f32.xlu0 %v773
    %v775 = vpop.xlane.xlu0 %774
    %v776 = vsel %vm529, %v695, 0.0
    %777 = vadd.xlane.f32.xlu0 %v776
    %v778 = vpop.xlane.xlu0 %777
    %v779 = vsel %vm529, %v697, 0.0
    %780 = vadd.xlane.f32.xlu0 %v779
    %v781 = vpop.xlane.xlu0 %780
    %v782 = vsel %vm529, %v699, 0.0
    %783 = vadd.xlane.f32.xlu0 %v782
    %v784 = vpop.xlane.xlu0 %783
    %v785 = vsel %vm529, %v701, 0.0
    %786 = vadd.xlane.f32.xlu0 %v785
    %v787 = vpop.xlane.xlu0 %786
    %v788 = vsel %vm529, %v703, 0.0
    %789 = vadd.xlane.f32.xlu0 %v788
    %v790 = vpop.xlane.xlu0 %789
    %v791 = vsel %vm529, %v705, 0.0
    %792 = vadd.xlane.f32.xlu0 %v791
    %v793 = vpop.xlane.xlu0 %792
    %v794 = vsel %vm529, %v707, 0.0
    %795 = vadd.xlane.f32.xlu0 %v794
    %v796 = vpop.xlane.xlu0 %795
    %v797 = vsel %vm529, %v709, 0.0
    %798 = vadd.xlane.f32.xlu0 %v797
    %v799 = vpop.xlane.xlu0 %798
    %v800 = vsel %vm529, %v711, 0.0
    %801 = vadd.xlane.f32.xlu0 %v800
    %v802 = vpop.xlane.xlu0 %801
    %v803 = vsel %vm529, %v713, 0.0
    %804 = vadd.xlane.f32.xlu0 %v803
    %v805 = vpop.xlane.xlu0 %804
    %v806 = vsel %vm529, %v715, 0.0
    %807 = vadd.xlane.f32.xlu0 %v806
    %v808 = vpop.xlane.xlu0 %807
    %v809 = vsel %vm529, %v717, 0.0
    %810 = vadd.xlane.f32.xlu0 %v809
    %v811 = vpop.xlane.xlu0 %810
    %v812 = vsel %vm529, %v719, 0.0
    %813 = vadd.xlane.f32.xlu0 %v812
    %v814 = vpop.xlane.xlu0 %813
    %v815 = vsel %vm529, %v721, 0.0
    %816 = vadd.xlane.f32.xlu0 %v815
    %v817 = vpop.xlane.xlu0 %816
    %v818 = vrcp.pop %v724
    %v819 = vrcp.pop %v727
    %v820 = vrcp.pop %v730
    %v821 = vrcp.pop %v733
    %v822 = vrcp.pop %v736
    %v823 = vrcp.pop %v739
    %v824 = vrcp.pop %v742
    %v825 = vrcp.pop %v745
    %v826 = vrcp.pop %v748
    %v827 = vrcp.pop %v751
    %v828 = vrcp.pop %v754
    %v829 = vrcp.pop %v757
    %v830 = vrcp.pop %v760
    %v831 = vrcp.pop %v763
    %v832 = vrcp.pop %v766
    %v833 = vrcp.pop %v769
    %v834 = vrcp.pop %v772
    %v835 = vrcp.pop %v775
    %v836 = vrcp.pop %v778
    %v837 = vrcp.pop %v781
    %v838 = vrcp.pop %v784
    %v839 = vrcp.pop %v787
    %v840 = vrcp.pop %v790
    %v841 = vrcp.pop %v793
    %v842 = vrcp.pop %v796
    %v843 = vrcp.pop %v799
    %v844 = vrcp.pop %v802
    %v845 = vrcp.pop %v805
    %v846 = vrcp.pop %v808
    %v847 = vrcp.pop %v811
    %v848 = vrcp.pop %v814
    %v849 = vrcp.pop %v817
    %v850 = vmul.f32 %v659, %v818
    %v851 = vmul.f32 %v661, %v819
    %v852 = vmul.f32 %v663, %v820
    %v853 = vmul.f32 %v665, %v821
    %v854 = vmul.f32 %v667, %v822
    %v855 = vmul.f32 %v669, %v823
    %v856 = vmul.f32 %v671, %v824
    %v857 = vmul.f32 %v673, %v825
    %v858 = vmul.f32 %v675, %v826
    %v859 = vmul.f32 %v677, %v827
    %v860 = vmul.f32 %v679, %v828
    %v861 = vmul.f32 %v681, %v829
    %v862 = vmul.f32 %v683, %v830
    %v863 = vmul.f32 %v685, %v831
    %v864 = vmul.f32 %v687, %v832
    %v865 = vmul.f32 %v689, %v833
    %v866 = vmul.f32 %v691, %v834
    %v867 = vmul.f32 %v693, %v835
    %v868 = vmul.f32 %v695, %v836
    %v869 = vmul.f32 %v697, %v837
    %v870 = vmul.f32 %v699, %v838
    %v871 = vmul.f32 %v701, %v839
    %v872 = vmul.f32 %v703, %v840
    %v873 = vmul.f32 %v705, %v841
    %v874 = vmul.f32 %v707, %v842
    %v875 = vmul.f32 %v709, %v843
    %v876 = vmul.f32 %v711, %v844
    %v877 = vmul.f32 %v713, %v845
    %v878 = vmul.f32 %v715, %v846
    %v879 = vmul.f32 %v717, %v847
    %v880 = vmul.f32 %v719, %v848
    %v881 = vmul.f32 %v721, %v849
    %v882 = vpack.c.bf16 %v851, %v850
    %v883 = vpack.c.bf16 %v853, %v852
    %v884 = vpack.c.bf16 %v855, %v854
    %v885 = vpack.c.bf16 %v857, %v856
    %v886 = vpack.c.bf16 %v859, %v858
    %v887 = vpack.c.bf16 %v861, %v860
    %v888 = vpack.c.bf16 %v863, %v862
    %v889 = vpack.c.bf16 %v865, %v864
    %v890 = vpack.c.bf16 %v867, %v866
    %v891 = vpack.c.bf16 %v869, %v868
    %v892 = vpack.c.bf16 %v871, %v870
    %v893 = vpack.c.bf16 %v873, %v872
    %v894 = vpack.c.bf16 %v875, %v874
    %v895 = vpack.c.bf16 %v877, %v876
    %v896 = vpack.c.bf16 %v879, %v878
    %v897 = vpack.c.bf16 %v881, %v880
    %v899 = vsel %vm529, %v882, 0
    %v902 = vsel %vm529, %v883, 0
    %v905 = vsel %vm529, %v884, 0
    %v908 = vsel %vm529, %v885, 0
    %v911 = vsel %vm529, %v886, 0
    %v914 = vsel %vm529, %v887, 0
    %v917 = vsel %vm529, %v888, 0
    %v920 = vsel %vm529, %v889, 0
    %v923 = vsel %vm529, %v890, 0
    %v926 = vsel %vm529, %v891, 0
    %v929 = vsel %vm529, %v892, 0
    %v932 = vsel %vm529, %v893, 0
    %v935 = vsel %vm529, %v894, 0
    %v938 = vsel %vm529, %v895, 0
    %v941 = vsel %vm529, %v896, 0
    %v944 = vsel %vm529, %v897, 0
    %946 = vmatpush.bf16.msra.mxu0 0
    %947 = vmatpush.bf16.msra.mxu0 0
    %948 = vmatpush.bf16.msra.mxu0 0
    %949 = vmatpush.bf16.msra.mxu0 0
    %950 = vmatpush.bf16.msra.mxu0 0
    %951 = vmatpush.bf16.msra.mxu0 0
    %952 = vmatpush.bf16.msra.mxu0 %v263
    %953 = vmatpush.bf16.msra.mxu0 %v262
    %954 = vmatmul.bf16.gmra.mxu0 %v899
    %v955 = vpop.f32.mrf.mxu0
    %v956 = vadd.f32 0.0, %v955
    %v957 = vpop.f32.mrf.mxu0
    %v958 = vadd.f32 0.0, %v957
    %959 = vmatmul.bf16.gmra.mxu0 %v902
    %v960 = vpop.f32.mrf.mxu0
    %v961 = vadd.f32 0.0, %v960
    %v962 = vpop.f32.mrf.mxu0
    %v963 = vadd.f32 0.0, %v962
    %964 = vmatmul.bf16.gmra.mxu0 %v905
    %v965 = vpop.f32.mrf.mxu0
    %v966 = vadd.f32 0.0, %v965
    %v967 = vpop.f32.mrf.mxu0
    %v968 = vadd.f32 0.0, %v967
    %969 = vmatmul.bf16.gmra.mxu0 %v908
    %v970 = vpop.f32.mrf.mxu0
    %v971 = vadd.f32 0.0, %v970
    %v972 = vpop.f32.mrf.mxu0
    %v973 = vadd.f32 0.0, %v972
    %974 = vmatmul.bf16.gmra.mxu0 %v911
    %v975 = vpop.f32.mrf.mxu0
    %v976 = vadd.f32 0.0, %v975
    %v977 = vpop.f32.mrf.mxu0
    %v978 = vadd.f32 0.0, %v977
    %979 = vmatmul.bf16.gmra.mxu0 %v914
    %v980 = vpop.f32.mrf.mxu0
    %v981 = vadd.f32 0.0, %v980
    %v982 = vpop.f32.mrf.mxu0
    %v983 = vadd.f32 0.0, %v982
    %984 = vmatmul.bf16.gmra.mxu0 %v917
    %v985 = vpop.f32.mrf.mxu0
    %v986 = vadd.f32 0.0, %v985
    %v987 = vpop.f32.mrf.mxu0
    %v988 = vadd.f32 0.0, %v987
    %989 = vmatmul.bf16.gmra.mxu0 %v920
    %v990 = vpop.f32.mrf.mxu0
    %v991 = vadd.f32 0.0, %v990
    %v992 = vpop.f32.mrf.mxu0
    %v993 = vadd.f32 0.0, %v992
    %994 = vmatmul.bf16.gmra.mxu0 %v923
    %v995 = vpop.f32.mrf.mxu0
    %v996 = vadd.f32 0.0, %v995
    %v997 = vpop.f32.mrf.mxu0
    %v998 = vadd.f32 0.0, %v997
    %999 = vmatmul.bf16.gmra.mxu0 %v926
    %v1000 = vpop.f32.mrf.mxu0
    %v1001 = vadd.f32 0.0, %v1000
    %v1002 = vpop.f32.mrf.mxu0
    %v1003 = vadd.f32 0.0, %v1002
    %1004 = vmatmul.bf16.gmra.mxu0 %v929
    %v1005 = vpop.f32.mrf.mxu0
    %v1006 = vadd.f32 0.0, %v1005
    %v1007 = vpop.f32.mrf.mxu0
    %v1008 = vadd.f32 0.0, %v1007
    %1009 = vmatmul.bf16.gmra.mxu0 %v932
    %v1010 = vpop.f32.mrf.mxu0
    %v1011 = vadd.f32 0.0, %v1010
    %v1012 = vpop.f32.mrf.mxu0
    %v1013 = vadd.f32 0.0, %v1012
    %1014 = vmatmul.bf16.gmra.mxu0 %v935
    %v1015 = vpop.f32.mrf.mxu0
    %v1016 = vadd.f32 0.0, %v1015
    %v1017 = vpop.f32.mrf.mxu0
    %v1018 = vadd.f32 0.0, %v1017
    %1019 = vmatmul.bf16.gmra.mxu0 %v938
    %v1020 = vpop.f32.mrf.mxu0
    %v1021 = vadd.f32 0.0, %v1020
    %v1022 = vpop.f32.mrf.mxu0
    %v1023 = vadd.f32 0.0, %v1022
    %1024 = vmatmul.bf16.gmra.mxu0 %v941
    %v1025 = vpop.f32.mrf.mxu0
    %v1026 = vadd.f32 0.0, %v1025
    %v1027 = vpop.f32.mrf.mxu0
    %v1028 = vadd.f32 0.0, %v1027
    %1029 = vmatmul.bf16.gmra.mxu0 %v944
    %v1030 = vpop.f32.mrf.mxu0
    %v1031 = vadd.f32 0.0, %v1030
    %v1032 = vpop.f32.mrf.mxu0
    %v1033 = vadd.f32 0.0, %v1032
    %1034 = vdwg.mxu0
    %v1035 = vmul.f32 %v956, %v264
    %v1036 = vmul.f32 %v958, %v265
    %v1037 = vmul.f32 %v961, %v266
    %v1038 = vmul.f32 %v963, %v267
    %v1039 = vmul.f32 %v966, %v268
    %v1040 = vmul.f32 %v968, %v269
    %v1041 = vmul.f32 %v971, %v270
    %v1042 = vmul.f32 %v973, %v271
    %v1043 = vmul.f32 %v976, %v272
    %v1044 = vmul.f32 %v978, %v273
    %v1045 = vmul.f32 %v981, %v274
    %v1046 = vmul.f32 %v983, %v275
    %v1047 = vmul.f32 %v986, %v276
    %v1048 = vmul.f32 %v988, %v277
    %v1049 = vmul.f32 %v991, %v278
    %v1050 = vmul.f32 %v993, %v279
    %v1051 = vmul.f32 %v996, %v280
    %v1052 = vmul.f32 %v998, %v281
    %v1053 = vmul.f32 %v1001, %v282
    %v1054 = vmul.f32 %v1003, %v283
    %v1055 = vmul.f32 %v1006, %v284
    %v1056 = vmul.f32 %v1008, %v285
    %v1057 = vmul.f32 %v1011, %v286
    %v1058 = vmul.f32 %v1013, %v287
    %v1059 = vmul.f32 %v1016, %v288
    %v1060 = vmul.f32 %v1018, %v289
    %v1061 = vmul.f32 %v1021, %v290
    %v1062 = vmul.f32 %v1023, %v291
    %v1063 = vmul.f32 %v1026, %v292
    %v1064 = vmul.f32 %v1028, %v293
    %v1065 = vmul.f32 %v1031, %v294
    %v1066 = vmul.f32 %v1033, %v295
    %v1067 = vadd.f32 %v1035, %v1039
    %v1068 = vadd.f32 %v1036, %v1040
    %v1069 = vadd.f32 %v1037, %v1041
    %v1070 = vadd.f32 %v1038, %v1042
    %v1071 = vadd.f32 %v1067, %v1043
    %v1072 = vadd.f32 %v1068, %v1044
    %v1073 = vadd.f32 %v1069, %v1045
    %v1074 = vadd.f32 %v1070, %v1046
    %v1075 = vadd.f32 %v1071, %v1047
    %v1076 = vadd.f32 %v1072, %v1048
    %v1077 = vadd.f32 %v1073, %v1049
    %v1078 = vadd.f32 %v1074, %v1050
    %v1079 = vadd.f32 %v1075, %v1051
    %v1080 = vadd.f32 %v1076, %v1052
    %v1081 = vadd.f32 %v1077, %v1053
    %v1082 = vadd.f32 %v1078, %v1054
    %v1083 = vadd.f32 %v1079, %v1055
    %v1084 = vadd.f32 %v1080, %v1056
    %v1085 = vadd.f32 %v1081, %v1057
    %v1086 = vadd.f32 %v1082, %v1058
    %v1087 = vadd.f32 %v1083, %v1059
    %v1088 = vadd.f32 %v1084, %v1060
    %v1089 = vadd.f32 %v1085, %v1061
    %v1090 = vadd.f32 %v1086, %v1062
    %v1091 = vadd.f32 %v1087, %v1063
    %v1092 = vadd.f32 %v1088, %v1064
    %v1093 = vadd.f32 %v1089, %v1065
    %v1094 = vadd.f32 %v1090, %v1066
    %v1095 = vpack.c.bf16 %v1092, %v1091
    %v1096 = vpack.c.bf16 %v1094, %v1093
    %v1097 = vld [vmem:[%s4] sm:$0xf]
    %v1098 = vld [vmem:[%s4 + $0x4] sm:$0xf]
    %v1099 = vld [vmem:[%s4 + $0x8] sm:$0xf]
    %v1100 = vld [vmem:[%s4 + $0xc] sm:$0xf]
    %v1101 = vld [vmem:[%s4 + $0x10] sm:$0xf]
    %v1102 = vld [vmem:[%s4 + $0x14] sm:$0xf]
    %v1103 = vld [vmem:[%s4 + $0x18] sm:$0xf]
    %v1104 = vld [vmem:[%s4 + $0x1c] sm:$0xf]
    %v1105 = vld [vmem:[%s4 + $0x20] sm:$0xf]
    %v1106 = vld [vmem:[%s4 + $0x24] sm:$0xf]
    %v1107 = vld [vmem:[%s4 + $0x28] sm:$0xf]
    %v1108 = vld [vmem:[%s4 + $0x2c] sm:$0xf]
    %v1109 = vld [vmem:[%s4 + $0x30] sm:$0xf]
    %v1110 = vld [vmem:[%s4 + $0x34] sm:$0xf]
    %v1111 = vld [vmem:[%s4 + $0x38] sm:$0xf]
    %v1112 = vld [vmem:[%s4 + $0x3c] sm:$0xf]
    %v1113 = vld [vmem:[%s5] sm:$0x1]
    %v1115 = vperm.slane %v1113, 0
    %v1133 = vunpack.c.l.b16 %v1097
    %v1134 = vunpack.c.l.b16 %v1098
    %v1135 = vunpack.c.l.b16 %v1099
    %v1136 = vunpack.c.l.b16 %v1100
    %v1137 = vunpack.c.l.b16 %v1101
    %v1138 = vunpack.c.l.b16 %v1102
    %v1139 = vunpack.c.l.b16 %v1103
    %v1140 = vunpack.c.l.b16 %v1104
    %v1141 = vunpack.c.l.b16 %v1105
    %v1142 = vunpack.c.l.b16 %v1106
    %v1143 = vunpack.c.l.b16 %v1107
    %v1144 = vunpack.c.l.b16 %v1108
    %v1145 = vunpack.c.l.b16 %v1109
    %v1146 = vunpack.c.l.b16 %v1110
    %v1147 = vunpack.c.l.b16 %v1111
    %v1148 = vunpack.c.l.b16 %v1112
    %v1149 = vpack.c.b16 %v1134, %v1133
    %v1150 = vpack.c.b16 %v1136, %v1135
    %v1151 = vpack.c.b16 %v1138, %v1137
    %v1152 = vpack.c.b16 %v1140, %v1139
    %v1153 = vpack.c.b16 %v1142, %v1141
    %v1154 = vpack.c.b16 %v1144, %v1143
    %v1155 = vpack.c.b16 %v1146, %v1145
    %v1156 = vpack.c.b16 %v1148, %v1147
    %1165 = vmatpush.bf16.msra.mxu0 %v1156
    %1166 = vmatpush.bf16.msra.mxu0 %v1155
    %1167 = vmatpush.bf16.msra.mxu0 %v1154
    %1168 = vmatpush.bf16.msra.mxu0 %v1153
    %1169 = vmatpush.bf16.msra.mxu0 %v1152
    %1170 = vmatpush.bf16.msra.mxu0 %v1151
    %1171 = vmatpush.bf16.msra.mxu0 %v1150
    %1172 = vmatpush.bf16.msra.mxu0 %v1149
    %1173 = vmatmul.bf16.gmra.mxu0 %v1095
    %v1174 = vpop.f32.mrf.mxu0
    %v1175 = vadd.f32 %v1115, %v1174
    %v1176 = vpop.f32.mrf.mxu0
    %v1177 = vadd.f32 %v1115, %v1176
    %1178 = vmatmul.bf16.gmra.mxu0 %v1096
    %v1179 = vpop.f32.mrf.mxu0
    %v1180 = vadd.f32 %v1115, %v1179
    %v1181 = vpop.f32.mrf.mxu0
    %v1182 = vadd.f32 %v1115, %v1181
    %1183 = vdwg.mxu0
    %v1184 = vadd.f32 %v1175, %v37
    %v1185 = vadd.f32 %v1177, %v38
    %v1186 = vadd.f32 %v1180, %v39
    %v1187 = vadd.f32 %v1182, %v40
    %1188 = vadd.xlane.f32.xlu0 %v1184
    %v1189 = vpop.xlane.xlu0 %1188
    %1190 = vadd.xlane.f32.xlu0 %v1185
    %v1191 = vpop.xlane.xlu0 %1190
    %1192 = vadd.xlane.f32.xlu0 %v1186
    %v1193 = vpop.xlane.xlu0 %1192
    %1194 = vadd.xlane.f32.xlu0 %v1187
    %v1195 = vpop.xlane.xlu0 %1194
    %v1196 = vrcp.pop 128.0
    %v1197 = vmul.f32 128.0, %v1196
    %v1198 = vsub.f32 1.0, %v1197
    %v1199 = vmul.f32 %v1196, %v1198
    %v1200 = vadd.f32 %v1196, %v1199
    %vm1201 = vweird.f32 %v1196
    %v1202 = vsel %vm1201, %v1196, %v1200
    %v1203 = vmul.f32 %v1189, %v1202
    %v1204 = vmul.f32 %v1191, %v1202
    %v1205 = vmul.f32 %v1193, %v1202
    %v1206 = vmul.f32 %v1195, %v1202
    %v1207 = vsub.f32 %v1184, %v1203
    %v1208 = vsub.f32 %v1185, %v1204
    %v1209 = vsub.f32 %v1186, %v1205
    %v1210 = vsub.f32 %v1187, %v1206
    %v1211 = vmul.f32 %v1207, %v1207
    %v1212 = vmul.f32 %v1208, %v1208
    %v1213 = vmul.f32 %v1209, %v1209
    %v1214 = vmul.f32 %v1210, %v1210
    %1215 = vadd.xlane.f32.xlu0 %v1211
    %v1216 = vpop.xlane.xlu0 %1215
    %1217 = vadd.xlane.f32.xlu0 %v1212
    %v1218 = vpop.xlane.xlu0 %1217
    %1219 = vadd.xlane.f32.xlu0 %v1213
    %v1220 = vpop.xlane.xlu0 %1219
    %1221 = vadd.xlane.f32.xlu0 %v1214
    %v1222 = vpop.xlane.xlu0 %1221
    %v1223 = vmul.f32 %v1216, 0.007874016
    %v1224 = vmul.f32 %v1218, 0.007874016
    %v1225 = vmul.f32 %v1220, 0.007874016
    %v1226 = vmul.f32 %v1222, 0.007874016
    %v1227 = vrcp.pop %v1223
    %v1228 = vmul.f32 %v1223, %v1227
    %v1229 = vsub.f32 1.0, %v1228
    %v1230 = vmul.f32 %v1227, %v1229
    %v1231 = vadd.f32 %v1227, %v1230
    %vm1232 = vweird.f32 %v1223
    %vm1233 = vweird.f32 %v1227
    %vm1234 = vmor %vm1232, %vm1233
    %v1235 = vsel %vm1234, %v1227, %v1231
    %v1236 = vand.u32 2147483647, %v1223
    %vm1237 = vcmp.eq.f32.partialorder %v1236, 8.507059e+37
    %v1238 = vand.u32 %v1223, 2147483648
    %v1239 = vor.u32 1.1754944e-38, %v1238
    %v1240 = vsel %vm1237, %v1239, %v1235
    %v1241 = vmul.f32 %v1207, %v1240
    %v1242 = vrcp.pop %v1224
    %v1243 = vmul.f32 %v1224, %v1242
    %v1244 = vsub.f32 1.0, %v1243
    %v1245 = vmul.f32 %v1242, %v1244
    %v1246 = vadd.f32 %v1242, %v1245
    %vm1247 = vweird.f32 %v1224
    %vm1248 = vweird.f32 %v1242
    %vm1249 = vmor %vm1247, %vm1248
    %v1250 = vsel %vm1249, %v1242, %v1246
    %v1251 = vand.u32 2147483647, %v1224
    %vm1252 = vcmp.eq.f32.partialorder %v1251, 8.507059e+37
    %v1253 = vand.u32 %v1224, 2147483648
    %v1254 = vor.u32 1.1754944e-38, %v1253
    %v1255 = vsel %vm1252, %v1254, %v1250
    %v1256 = vmul.f32 %v1208, %v1255
    %v1257 = vrcp.pop %v1225
    %v1258 = vmul.f32 %v1225, %v1257
    %v1259 = vsub.f32 1.0, %v1258
    %v1260 = vmul.f32 %v1257, %v1259
    %v1261 = vadd.f32 %v1257, %v1260
    %vm1262 = vweird.f32 %v1225
    %vm1263 = vweird.f32 %v1257
    %vm1264 = vmor %vm1262, %vm1263
    %v1265 = vsel %vm1264, %v1257, %v1261
    %v1266 = vand.u32 2147483647, %v1225
    %vm1267 = vcmp.eq.f32.partialorder %v1266, 8.507059e+37
    %v1268 = vand.u32 %v1225, 2147483648
    %v1269 = vor.u32 1.1754944e-38, %v1268
    %v1270 = vsel %vm1267, %v1269, %v1265
    %v1271 = vmul.f32 %v1209, %v1270
    %v1272 = vrcp.pop %v1226
    %v1273 = vmul.f32 %v1226, %v1272
    %v1274 = vsub.f32 1.0, %v1273
    %v1275 = vmul.f32 %v1272, %v1274
    %v1276 = vadd.f32 %v1272, %v1275
    %vm1277 = vweird.f32 %v1226
    %vm1278 = vweird.f32 %v1272
    %vm1279 = vmor %vm1277, %vm1278
    %v1280 = vsel %vm1279, %v1272, %v1276
    %v1281 = vand.u32 2147483647, %v1226
    %vm1282 = vcmp.eq.f32.partialorder %v1281, 8.507059e+37
    %v1283 = vand.u32 %v1226, 2147483648
    %v1284 = vor.u32 1.1754944e-38, %v1283
    %v1285 = vsel %vm1282, %v1284, %v1280
    %v1286 = vmul.f32 %v1210, %v1285
    %v1287 = vpack.c.bf16 %v1256, %v1241
    %v1288 = vpack.c.bf16 %v1286, %v1271
    %v1289 = vld [vmem:[%s6] sm:$0xff]
    %v1290 = vld [vmem:[%s6 + $0x8] sm:$0xff]
    %v1291 = vld [vmem:[%s6 + $0x10] sm:$0xff]
    %v1292 = vld [vmem:[%s6 + $0x18] sm:$0xff]
    %v1293 = vld [vmem:[%s6 + $0x20] sm:$0xff]
    %v1294 = vld [vmem:[%s6 + $0x28] sm:$0xff]
    %v1295 = vld [vmem:[%s6 + $0x30] sm:$0xff]
    %v1296 = vld [vmem:[%s6 + $0x38] sm:$0xff]
    %v1297 = vld [vmem:[%s6 + $0x40] sm:$0xff]
    %v1298 = vld [vmem:[%s6 + $0x48] sm:$0xff]
    %v1299 = vld [vmem:[%s6 + $0x50] sm:$0xff]
    %v1300 = vld [vmem:[%s6 + $0x58] sm:$0xff]
    %v1301 = vld [vmem:[%s6 + $0x60] sm:$0xff]
    %v1302 = vld [vmem:[%s6 + $0x68] sm:$0xff]
    %v1303 = vld [vmem:[%s6 + $0x70] sm:$0xff]
    %v1304 = vld [vmem:[%s6 + $0x78] sm:$0xff]
    %v1305 = vld [vmem:[%s6 + $0x80] sm:$0xff]
    %v1306 = vld [vmem:[%s6 + $0x88] sm:$0xff]
    %v1307 = vld [vmem:[%s6 + $0x90] sm:$0xff]
    %v1308 = vld [vmem:[%s6 + $0x98] sm:$0xff]
    %v1309 = vld [vmem:[%s6 + $0xa0] sm:$0xff]
    %v1310 = vld [vmem:[%s6 + $0xa8] sm:$0xff]
    %v1311 = vld [vmem:[%s6 + $0xb0] sm:$0xff]
    %v1312 = vld [vmem:[%s6 + $0xb8] sm:$0xff]
    %v1313 = vld [vmem:[%s6 + $0xc0] sm:$0xff]
    %v1314 = vld [vmem:[%s6 + $0xc8] sm:$0xff]
    %v1315 = vld [vmem:[%s6 + $0xd0] sm:$0xff]
    %v1316 = vld [vmem:[%s6 + $0xd8] sm:$0xff]
    %v1317 = vld [vmem:[%s6 + $0xe0] sm:$0xff]
    %v1318 = vld [vmem:[%s6 + $0xe8] sm:$0xff]
    %v1319 = vld [vmem:[%s6 + $0xf0] sm:$0xff]
    %v1320 = vld [vmem:[%s6 + $0xf8] sm:$0xff]
    %v1321 = vld [vmem:[%s7] sm:$0xf]
    %v1323 = vperm.slane %v1321, 0
    %v1324 = vperm.slane %v1321, 1
    %v1325 = vperm.slane %v1321, 2
    %v1326 = vperm.slane %v1321, 3
    %v1363 = vunpack.c.l.b16 %v1289
    %v1364 = vunpack.c.h.b16 %v1289
    %v1365 = vunpack.c.l.b16 %v1290
    %v1366 = vunpack.c.h.b16 %v1290
    %v1367 = vunpack.c.l.b16 %v1291
    %v1368 = vunpack.c.h.b16 %v1291
    %v1369 = vunpack.c.l.b16 %v1292
    %v1370 = vunpack.c.h.b16 %v1292
    %v1371 = vunpack.c.l.b16 %v1293
    %v1372 = vunpack.c.h.b16 %v1293
    %v1373 = vunpack.c.l.b16 %v1294
    %v1374 = vunpack.c.h.b16 %v1294
    %v1375 = vunpack.c.l.b16 %v1295
    %v1376 = vunpack.c.h.b16 %v1295
    %v1377 = vunpack.c.l.b16 %v1296
    %v1378 = vunpack.c.h.b16 %v1296
    %v1379 = vunpack.c.l.b16 %v1297
    %v1380 = vunpack.c.h.b16 %v1297
    %v1381 = vunpack.c.l.b16 %v1298
    %v1382 = vunpack.c.h.b16 %v1298
    %v1383 = vunpack.c.l.b16 %v1299
    %v1384 = vunpack.c.h.b16 %v1299
    %v1385 = vunpack.c.l.b16 %v1300
    %v1386 = vunpack.c.h.b16 %v1300
    %v1387 = vunpack.c.l.b16 %v1301
    %v1388 = vunpack.c.h.b16 %v1301
    %v1389 = vunpack.c.l.b16 %v1302
    %v1390 = vunpack.c.h.b16 %v1302
    %v1391 = vunpack.c.l.b16 %v1303
    %v1392 = vunpack.c.h.b16 %v1303
    %v1393 = vunpack.c.l.b16 %v1304
    %v1394 = vunpack.c.h.b16 %v1304
    %v1395 = vunpack.c.l.b16 %v1305
    %v1396 = vunpack.c.h.b16 %v1305
    %v1397 = vunpack.c.l.b16 %v1306
    %v1398 = vunpack.c.h.b16 %v1306
    %v1399 = vunpack.c.l.b16 %v1307
    %v1400 = vunpack.c.h.b16 %v1307
    %v1401 = vunpack.c.l.b16 %v1308
    %v1402 = vunpack.c.h.b16 %v1308
    %v1403 = vunpack.c.l.b16 %v1309
    %v1404 = vunpack.c.h.b16 %v1309
    %v1405 = vunpack.c.l.b16 %v1310
    %v1406 = vunpack.c.h.b16 %v1310
    %v1407 = vunpack.c.l.b16 %v1311
    %v1408 = vunpack.c.h.b16 %v1311
    %v1409 = vunpack.c.l.b16 %v1312
    %v1410 = vunpack.c.h.b16 %v1312
    %v1411 = vunpack.c.l.b16 %v1313
    %v1412 = vunpack.c.h.b16 %v1313
    %v1413 = vunpack.c.l.b16 %v1314
    %v1414 = vunpack.c.h.b16 %v1314
    %v1415 = vunpack.c.l.b16 %v1315
    %v1416 = vunpack.c.h.b16 %v1315
    %v1417 = vunpack.c.l.b16 %v1316
    %v1418 = vunpack.c.h.b16 %v1316
    %v1419 = vunpack.c.l.b16 %v1317
    %v1420 = vunpack.c.h.b16 %v1317
    %v1421 = vunpack.c.l.b16 %v1318
    %v1422 = vunpack.c.h.b16 %v1318
    %v1423 = vunpack.c.l.b16 %v1319
    %v1424 = vunpack.c.h.b16 %v1319
    %v1425 = vunpack.c.l.b16 %v1320
    %v1426 = vunpack.c.h.b16 %v1320
    %v1427 = vpack.c.b16 %v1367, %v1363
    %v1428 = vpack.c.b16 %v1368, %v1364
    %v1429 = vpack.c.b16 %v1369, %v1365
    %v1430 = vpack.c.b16 %v1370, %v1366
    %v1431 = vpack.c.b16 %v1375, %v1371
    %v1432 = vpack.c.b16 %v1376, %v1372
    %v1433 = vpack.c.b16 %v1377, %v1373
    %v1434 = vpack.c.b16 %v1378, %v1374
    %v1435 = vpack.c.b16 %v1383, %v1379
    %v1436 = vpack.c.b16 %v1384, %v1380
    %v1437 = vpack.c.b16 %v1385, %v1381
    %v1438 = vpack.c.b16 %v1386, %v1382
    %v1439 = vpack.c.b16 %v1391, %v1387
    %v1440 = vpack.c.b16 %v1392, %v1388
    %v1441 = vpack.c.b16 %v1393, %v1389
    %v1442 = vpack.c.b16 %v1394, %v1390
    %v1443 = vpack.c.b16 %v1399, %v1395
    %v1444 = vpack.c.b16 %v1400, %v1396
    %v1445 = vpack.c.b16 %v1401, %v1397
    %v1446 = vpack.c.b16 %v1402, %v1398
    %v1447 = vpack.c.b16 %v1407, %v1403
    %v1448 = vpack.c.b16 %v1408, %v1404
    %v1449 = vpack.c.b16 %v1409, %v1405
    %v1450 = vpack.c.b16 %v1410, %v1406
    %v1451 = vpack.c.b16 %v1415, %v1411
    %v1452 = vpack.c.b16 %v1416, %v1412
    %v1453 = vpack.c.b16 %v1417, %v1413
    %v1454 = vpack.c.b16 %v1418, %v1414
    %v1455 = vpack.c.b16 %v1423, %v1419
    %v1456 = vpack.c.b16 %v1424, %v1420
    %v1457 = vpack.c.b16 %v1425, %v1421
    %v1458 = vpack.c.b16 %v1426, %v1422
    %1491 = vmatpush.bf16.msra.mxu0 %v1455
    %1492 = vmatpush.bf16.msra.mxu0 %v1451
    %1493 = vmatpush.bf16.msra.mxu0 %v1447
    %1494 = vmatpush.bf16.msra.mxu0 %v1443
    %1495 = vmatpush.bf16.msra.mxu0 %v1439
    %1496 = vmatpush.bf16.msra.mxu0 %v1435
    %1497 = vmatpush.bf16.msra.mxu0 %v1431
    %1498 = vmatpush.bf16.msra.mxu0 %v1427
    %1499 = vmatmul.bf16.gmra.mxu0 %v1287
    %v1500 = vpop.f32.mrf.mxu0
    %v1501 = vadd.f32 %v1323, %v1500
    %v1502 = vpop.f32.mrf.mxu0
    %v1503 = vadd.f32 %v1323, %v1502
    %1504 = vmatmul.bf16.gmra.mxu0 %v1288
    %v1505 = vpop.f32.mrf.mxu0
    %v1506 = vadd.f32 %v1323, %v1505
    %v1507 = vpop.f32.mrf.mxu0
    %v1508 = vadd.f32 %v1323, %v1507
    %1509 = vdwg.mxu0
    %1510 = vmatpush.bf16.msra.mxu0 %v1456
    %1511 = vmatpush.bf16.msra.mxu0 %v1452
    %1512 = vmatpush.bf16.msra.mxu0 %v1448
    %1513 = vmatpush.bf16.msra.mxu0 %v1444
    %1514 = vmatpush.bf16.msra.mxu0 %v1440
    %1515 = vmatpush.bf16.msra.mxu0 %v1436
    %1516 = vmatpush.bf16.msra.mxu0 %v1432
    %1517 = vmatpush.bf16.msra.mxu0 %v1428
    %1518 = vmatmul.bf16.gmra.mxu0 %v1287
    %v1519 = vpop.f32.mrf.mxu0
    %v1520 = vadd.f32 %v1324, %v1519
    %v1521 = vpop.f32.mrf.mxu0
    %v1522 = vadd.f32 %v1324, %v1521
    %1523 = vmatmul.bf16.gmra.mxu0 %v1288
    %v1524 = vpop.f32.mrf.mxu0
    %v1525 = vadd.f32 %v1324, %v1524
    %v1526 = vpop.f32.mrf.mxu0
    %v1527 = vadd.f32 %v1324, %v1526
    %1528 = vdwg.mxu0
    %1529 = vmatpush.bf16.msra.mxu0 %v1457
    %1530 = vmatpush.bf16.msra.mxu0 %v1453
    %1531 = vmatpush.bf16.msra.mxu0 %v1449
    %1532 = vmatpush.bf16.msra.mxu0 %v1445
    %1533 = vmatpush.bf16.msra.mxu0 %v1441
    %1534 = vmatpush.bf16.msra.mxu0 %v1437
    %1535 = vmatpush.bf16.msra.mxu0 %v1433
    %1536 = vmatpush.bf16.msra.mxu0 %v1429
    %1537 = vmatmul.bf16.gmra.mxu0 %v1287
    %v1538 = vpop.f32.mrf.mxu0
    %v1539 = vadd.f32 %v1325, %v1538
    %v1540 = vpop.f32.mrf.mxu0
    %v1541 = vadd.f32 %v1325, %v1540
    %1542 = vmatmul.bf16.gmra.mxu0 %v1288
    %v1543 = vpop.f32.mrf.mxu0
    %v1544 = vadd.f32 %v1325, %v1543
    %v1545 = vpop.f32.mrf.mxu0
    %v1546 = vadd.f32 %v1325, %v1545
    %1547 = vdwg.mxu0
    %1548 = vmatpush.bf16.msra.mxu0 %v1458
    %1549 = vmatpush.bf16.msra.mxu0 %v1454
    %1550 = vmatpush.bf16.msra.mxu0 %v1450
    %1551 = vmatpush.bf16.msra.mxu0 %v1446
    %1552 = vmatpush.bf16.msra.mxu0 %v1442
    %1553 = vmatpush.bf16.msra.mxu0 %v1438
    %1554 = vmatpush.bf16.msra.mxu0 %v1434
    %1555 = vmatpush.bf16.msra.mxu0 %v1430
    %1556 = vmatmul.bf16.gmra.mxu0 %v1287
    %v1557 = vpop.f32.mrf.mxu0
    %v1558 = vadd.f32 %v1326, %v1557
    %v1559 = vpop.f32.mrf.mxu0
    %v1560 = vadd.f32 %v1326, %v1559
    %1561 = vmatmul.bf16.gmra.mxu0 %v1288
    %v1562 = vpop.f32.mrf.mxu0
    %v1563 = vadd.f32 %v1326, %v1562
    %v1564 = vpop.f32.mrf.mxu0
    %v1565 = vadd.f32 %v1326, %v1564
    %1566 = vdwg.mxu0
    %v1567 = vmax.f32 %v1501, 0.0
    %v1568 = vmax.f32 %v1520, 0.0
    %v1569 = vmax.f32 %v1539, 0.0
    %v1570 = vmax.f32 %v1558, 0.0
    %v1571 = vmax.f32 %v1503, 0.0
    %v1572 = vmax.f32 %v1522, 0.0
    %v1573 = vmax.f32 %v1541, 0.0
    %v1574 = vmax.f32 %v1560, 0.0
    %v1575 = vmax.f32 %v1506, 0.0
    %v1576 = vmax.f32 %v1525, 0.0
    %v1577 = vmax.f32 %v1544, 0.0
    %v1578 = vmax.f32 %v1563, 0.0
    %v1579 = vmax.f32 %v1508, 0.0
    %v1580 = vmax.f32 %v1527, 0.0
    %v1581 = vmax.f32 %v1546, 0.0
    %v1582 = vmax.f32 %v1565, 0.0
    %v1583 = vpack.c.bf16 %v1571, %v1567
    %v1584 = vpack.c.bf16 %v1572, %v1568
    %v1585 = vpack.c.bf16 %v1573, %v1569
    %v1586 = vpack.c.bf16 %v1574, %v1570
    %v1587 = vpack.c.bf16 %v1579, %v1575
    %v1588 = vpack.c.bf16 %v1580, %v1576
    %v1589 = vpack.c.bf16 %v1581, %v1577
    %v1590 = vpack.c.bf16 %v1582, %v1578
    %v1591 = vld [vmem:[%s8] sm:$0xf]
    %v1592 = vld [vmem:[%s8 + $0x4] sm:$0xf]
    %v1593 = vld [vmem:[%s8 + $0x8] sm:$0xf]
    %v1594 = vld [vmem:[%s8 + $0xc] sm:$0xf]
    %v1595 = vld [vmem:[%s8 + $0x10] sm:$0xf]
    %v1596 = vld [vmem:[%s8 + $0x14] sm:$0xf]
    %v1597 = vld [vmem:[%s8 + $0x18] sm:$0xf]
    %v1598 = vld [vmem:[%s8 + $0x1c] sm:$0xf]
    %v1599 = vld [vmem:[%s8 + $0x20] sm:$0xf]
    %v1600 = vld [vmem:[%s8 + $0x24] sm:$0xf]
    %v1601 = vld [vmem:[%s8 + $0x28] sm:$0xf]
    %v1602 = vld [vmem:[%s8 + $0x2c] sm:$0xf]
    %v1603 = vld [vmem:[%s8 + $0x30] sm:$0xf]
    %v1604 = vld [vmem:[%s8 + $0x34] sm:$0xf]
    %v1605 = vld [vmem:[%s8 + $0x38] sm:$0xf]
    %v1606 = vld [vmem:[%s8 + $0x3c] sm:$0xf]
    %v1607 = vld [vmem:[%s8 + $0x40] sm:$0xf]
    %v1608 = vld [vmem:[%s8 + $0x44] sm:$0xf]
    %v1609 = vld [vmem:[%s8 + $0x48] sm:$0xf]
    %v1610 = vld [vmem:[%s8 + $0x4c] sm:$0xf]
    %v1611 = vld [vmem:[%s8 + $0x50] sm:$0xf]
    %v1612 = vld [vmem:[%s8 + $0x54] sm:$0xf]
    %v1613 = vld [vmem:[%s8 + $0x58] sm:$0xf]
    %v1614 = vld [vmem:[%s8 + $0x5c] sm:$0xf]
    %v1615 = vld [vmem:[%s8 + $0x60] sm:$0xf]
    %v1616 = vld [vmem:[%s8 + $0x64] sm:$0xf]
    %v1617 = vld [vmem:[%s8 + $0x68] sm:$0xf]
    %v1618 = vld [vmem:[%s8 + $0x6c] sm:$0xf]
    %v1619 = vld [vmem:[%s8 + $0x70] sm:$0xf]
    %v1620 = vld [vmem:[%s8 + $0x74] sm:$0xf]
    %v1621 = vld [vmem:[%s8 + $0x78] sm:$0xf]
    %v1622 = vld [vmem:[%s8 + $0x7c] sm:$0xf]
    %v1623 = vld [vmem:[%s8 + $0x80] sm:$0xf]
    %v1624 = vld [vmem:[%s8 + $0x84] sm:$0xf]
    %v1625 = vld [vmem:[%s8 + $0x88] sm:$0xf]
    %v1626 = vld [vmem:[%s8 + $0x8c] sm:$0xf]
    %v1627 = vld [vmem:[%s8 + $0x90] sm:$0xf]
    %v1628 = vld [vmem:[%s8 + $0x94] sm:$0xf]
    %v1629 = vld [vmem:[%s8 + $0x98] sm:$0xf]
    %v1630 = vld [vmem:[%s8 + $0x9c] sm:$0xf]
    %v1631 = vld [vmem:[%s8 + $0xa0] sm:$0xf]
    %v1632 = vld [vmem:[%s8 + $0xa4] sm:$0xf]
    %v1633 = vld [vmem:[%s8 + $0xa8] sm:$0xf]
    %v1634 = vld [vmem:[%s8 + $0xac] sm:$0xf]
    %v1635 = vld [vmem:[%s8 + $0xb0] sm:$0xf]
    %v1636 = vld [vmem:[%s8 + $0xb4] sm:$0xf]
    %v1637 = vld [vmem:[%s8 + $0xb8] sm:$0xf]
    %v1638 = vld [vmem:[%s8 + $0xbc] sm:$0xf]
    %v1639 = vld [vmem:[%s8 + $0xc0] sm:$0xf]
    %v1640 = vld [vmem:[%s8 + $0xc4] sm:$0xf]
    %v1641 = vld [vmem:[%s8 + $0xc8] sm:$0xf]
    %v1642 = vld [vmem:[%s8 + $0xcc] sm:$0xf]
    %v1643 = vld [vmem:[%s8 + $0xd0] sm:$0xf]
    %v1644 = vld [vmem:[%s8 + $0xd4] sm:$0xf]
    %v1645 = vld [vmem:[%s8 + $0xd8] sm:$0xf]
    %v1646 = vld [vmem:[%s8 + $0xdc] sm:$0xf]
    %v1647 = vld [vmem:[%s8 + $0xe0] sm:$0xf]
    %v1648 = vld [vmem:[%s8 + $0xe4] sm:$0xf]
    %v1649 = vld [vmem:[%s8 + $0xe8] sm:$0xf]
    %v1650 = vld [vmem:[%s8 + $0xec] sm:$0xf]
    %v1651 = vld [vmem:[%s8 + $0xf0] sm:$0xf]
    %v1652 = vld [vmem:[%s8 + $0xf4] sm:$0xf]
    %v1653 = vld [vmem:[%s8 + $0xf8] sm:$0xf]
    %v1654 = vld [vmem:[%s8 + $0xfc] sm:$0xf]
    %v1655 = vld [vmem:[%s9] sm:$0x1]
    %v1657 = vperm.slane %v1655, 0
    %v1723 = vunpack.c.l.b16 %v1591
    %v1724 = vunpack.c.l.b16 %v1592
    %v1725 = vunpack.c.l.b16 %v1593
    %v1726 = vunpack.c.l.b16 %v1594
    %v1727 = vunpack.c.l.b16 %v1595
    %v1728 = vunpack.c.l.b16 %v1596
    %v1729 = vunpack.c.l.b16 %v1597
    %v1730 = vunpack.c.l.b16 %v1598
    %v1731 = vunpack.c.l.b16 %v1599
    %v1732 = vunpack.c.l.b16 %v1600
    %v1733 = vunpack.c.l.b16 %v1601
    %v1734 = vunpack.c.l.b16 %v1602
    %v1735 = vunpack.c.l.b16 %v1603
    %v1736 = vunpack.c.l.b16 %v1604
    %v1737 = vunpack.c.l.b16 %v1605
    %v1738 = vunpack.c.l.b16 %v1606
    %v1739 = vunpack.c.l.b16 %v1607
    %v1740 = vunpack.c.l.b16 %v1608
    %v1741 = vunpack.c.l.b16 %v1609
    %v1742 = vunpack.c.l.b16 %v1610
    %v1743 = vunpack.c.l.b16 %v1611
    %v1744 = vunpack.c.l.b16 %v1612
    %v1745 = vunpack.c.l.b16 %v1613
    %v1746 = vunpack.c.l.b16 %v1614
    %v1747 = vunpack.c.l.b16 %v1615
    %v1748 = vunpack.c.l.b16 %v1616
    %v1749 = vunpack.c.l.b16 %v1617
    %v1750 = vunpack.c.l.b16 %v1618
    %v1751 = vunpack.c.l.b16 %v1619
    %v1752 = vunpack.c.l.b16 %v1620
    %v1753 = vunpack.c.l.b16 %v1621
    %v1754 = vunpack.c.l.b16 %v1622
    %v1755 = vunpack.c.l.b16 %v1623
    %v1756 = vunpack.c.l.b16 %v1624
    %v1757 = vunpack.c.l.b16 %v1625
    %v1758 = vunpack.c.l.b16 %v1626
    %v1759 = vunpack.c.l.b16 %v1627
    %v1760 = vunpack.c.l.b16 %v1628
    %v1761 = vunpack.c.l.b16 %v1629
    %v1762 = vunpack.c.l.b16 %v1630
    %v1763 = vunpack.c.l.b16 %v1631
    %v1764 = vunpack.c.l.b16 %v1632
    %v1765 = vunpack.c.l.b16 %v1633
    %v1766 = vunpack.c.l.b16 %v1634
    %v1767 = vunpack.c.l.b16 %v1635
    %v1768 = vunpack.c.l.b16 %v1636
    %v1769 = vunpack.c.l.b16 %v1637
    %v1770 = vunpack.c.l.b16 %v1638
    %v1771 = vunpack.c.l.b16 %v1639
    %v1772 = vunpack.c.l.b16 %v1640
    %v1773 = vunpack.c.l.b16 %v1641
    %v1774 = vunpack.c.l.b16 %v1642
    %v1775 = vunpack.c.l.b16 %v1643
    %v1776 = vunpack.c.l.b16 %v1644
    %v1777 = vunpack.c.l.b16 %v1645
    %v1778 = vunpack.c.l.b16 %v1646
    %v1779 = vunpack.c.l.b16 %v1647
    %v1780 = vunpack.c.l.b16 %v1648
    %v1781 = vunpack.c.l.b16 %v1649
    %v1782 = vunpack.c.l.b16 %v1650
    %v1783 = vunpack.c.l.b16 %v1651
    %v1784 = vunpack.c.l.b16 %v1652
    %v1785 = vunpack.c.l.b16 %v1653
    %v1786 = vunpack.c.l.b16 %v1654
    %v1787 = vpack.c.b16 %v1724, %v1723
    %v1788 = vpack.c.b16 %v1726, %v1725
    %v1789 = vpack.c.b16 %v1728, %v1727
    %v1790 = vpack.c.b16 %v1730, %v1729
    %v1791 = vpack.c.b16 %v1732, %v1731
    %v1792 = vpack.c.b16 %v1734, %v1733
    %v1793 = vpack.c.b16 %v1736, %v1735
    %v1794 = vpack.c.b16 %v1738, %v1737
    %v1795 = vpack.c.b16 %v1740, %v1739
    %v1796 = vpack.c.b16 %v1742, %v1741
    %v1797 = vpack.c.b16 %v1744, %v1743
    %v1798 = vpack.c.b16 %v1746, %v1745
    %v1799 = vpack.c.b16 %v1748, %v1747
    %v1800 = vpack.c.b16 %v1750, %v1749
    %v1801 = vpack.c.b16 %v1752, %v1751
    %v1802 = vpack.c.b16 %v1754, %v1753
    %v1803 = vpack.c.b16 %v1756, %v1755
    %v1804 = vpack.c.b16 %v1758, %v1757
    %v1805 = vpack.c.b16 %v1760, %v1759
    %v1806 = vpack.c.b16 %v1762, %v1761
    %v1807 = vpack.c.b16 %v1764, %v1763
    %v1808 = vpack.c.b16 %v1766, %v1765
    %v1809 = vpack.c.b16 %v1768, %v1767
    %v1810 = vpack.c.b16 %v1770, %v1769
    %v1811 = vpack.c.b16 %v1772, %v1771
    %v1812 = vpack.c.b16 %v1774, %v1773
    %v1813 = vpack.c.b16 %v1776, %v1775
    %v1814 = vpack.c.b16 %v1778, %v1777
    %v1815 = vpack.c.b16 %v1780, %v1779
    %v1816 = vpack.c.b16 %v1782, %v1781
    %v1817 = vpack.c.b16 %v1784, %v1783
    %v1818 = vpack.c.b16 %v1786, %v1785
    %1851 = vmatpush.bf16.msra.mxu0 %v1794
    %1852 = vmatpush.bf16.msra.mxu0 %v1793
    %1853 = vmatpush.bf16.msra.mxu0 %v1792
    %1854 = vmatpush.bf16.msra.mxu0 %v1791
    %1855 = vmatpush.bf16.msra.mxu0 %v1790
    %1856 = vmatpush.bf16.msra.mxu0 %v1789
    %1857 = vmatpush.bf16.msra.mxu0 %v1788
    %1858 = vmatpush.bf16.msra.mxu0 %v1787
    %1859 = vmatmul.bf16.gmra.mxu0 %v1583
    %v1860 = vpop.f32.mrf.mxu0
    %v1861 = vadd.f32 %v1657, %v1860
    %v1862 = vpop.f32.mrf.mxu0
    %v1863 = vadd.f32 %v1657, %v1862
    %1864 = vmatmul.bf16.gmra.mxu0 %v1587
    %v1865 = vpop.f32.mrf.mxu0
    %v1866 = vadd.f32 %v1657, %v1865
    %v1867 = vpop.f32.mrf.mxu0
    %v1868 = vadd.f32 %v1657, %v1867
    %1869 = vdwg.mxu0
    %1870 = vmatpush.bf16.msra.mxu0 %v1802
    %1871 = vmatpush.bf16.msra.mxu0 %v1801
    %1872 = vmatpush.bf16.msra.mxu0 %v1800
    %1873 = vmatpush.bf16.msra.mxu0 %v1799
    %1874 = vmatpush.bf16.msra.mxu0 %v1798
    %1875 = vmatpush.bf16.msra.mxu0 %v1797
    %1876 = vmatpush.bf16.msra.mxu0 %v1796
    %1877 = vmatpush.bf16.msra.mxu0 %v1795
    %1878 = vmatmul.bf16.gmra.mxu0 %v1584
    %v1879 = vpop.f32.mrf.mxu0
    %v1880 = vadd.f32 %v1861, %v1879
    %v1881 = vpop.f32.mrf.mxu0
    %v1882 = vadd.f32 %v1863, %v1881
    %1883 = vmatmul.bf16.gmra.mxu0 %v1588
    %v1884 = vpop.f32.mrf.mxu0
    %v1885 = vadd.f32 %v1866, %v1884
    %v1886 = vpop.f32.mrf.mxu0
    %v1887 = vadd.f32 %v1868, %v1886
    %1888 = vdwg.mxu0
    %1889 = vmatpush.bf16.msra.mxu0 %v1810
    %1890 = vmatpush.bf16.msra.mxu0 %v1809
    %1891 = vmatpush.bf16.msra.mxu0 %v1808
    %1892 = vmatpush.bf16.msra.mxu0 %v1807
    %1893 = vmatpush.bf16.msra.mxu0 %v1806
    %1894 = vmatpush.bf16.msra.mxu0 %v1805
    %1895 = vmatpush.bf16.msra.mxu0 %v1804
    %1896 = vmatpush.bf16.msra.mxu0 %v1803
    %1897 = vmatmul.bf16.gmra.mxu0 %v1585
    %v1898 = vpop.f32.mrf.mxu0
    %v1899 = vadd.f32 %v1880, %v1898
    %v1900 = vpop.f32.mrf.mxu0
    %v1901 = vadd.f32 %v1882, %v1900
    %1902 = vmatmul.bf16.gmra.mxu0 %v1589
    %v1903 = vpop.f32.mrf.mxu0
    %v1904 = vadd.f32 %v1885, %v1903
    %v1905 = vpop.f32.mrf.mxu0
    %v1906 = vadd.f32 %v1887, %v1905
    %1907 = vdwg.mxu0
    %1908 = vmatpush.bf16.msra.mxu0 %v1818
    %1909 = vmatpush.bf16.msra.mxu0 %v1817
    %1910 = vmatpush.bf16.msra.mxu0 %v1816
    %1911 = vmatpush.bf16.msra.mxu0 %v1815
    %1912 = vmatpush.bf16.msra.mxu0 %v1814
    %1913 = vmatpush.bf16.msra.mxu0 %v1813
    %1914 = vmatpush.bf16.msra.mxu0 %v1812
    %1915 = vmatpush.bf16.msra.mxu0 %v1811
    %1916 = vmatmul.bf16.gmra.mxu0 %v1586
    %v1917 = vpop.f32.mrf.mxu0
    %v1918 = vadd.f32 %v1899, %v1917
    %v1919 = vpop.f32.mrf.mxu0
    %v1920 = vadd.f32 %v1901, %v1919
    %1921 = vmatmul.bf16.gmra.mxu0 %v1590
    %v1922 = vpop.f32.mrf.mxu0
    %v1923 = vadd.f32 %v1904, %v1922
    %v1924 = vpop.f32.mrf.mxu0
    %v1925 = vadd.f32 %v1906, %v1924
    %1926 = vdwg.mxu0
    %v1927 = vadd.f32 %v1918, %v1241
    %v1928 = vadd.f32 %v1920, %v1256
    %v1929 = vadd.f32 %v1923, %v1271
    %v1930 = vadd.f32 %v1925, %v1286
    %1931 = vadd.xlane.f32.xlu0 %v1927
    %v1932 = vpop.xlane.xlu0 %1931
    %1933 = vadd.xlane.f32.xlu0 %v1928
    %v1934 = vpop.xlane.xlu0 %1933
    %1935 = vadd.xlane.f32.xlu0 %v1929
    %v1936 = vpop.xlane.xlu0 %1935
    %1937 = vadd.xlane.f32.xlu0 %v1930
    %v1938 = vpop.xlane.xlu0 %1937
    %v1939 = vmul.f32 %v1932, %v1202
    %v1940 = vmul.f32 %v1934, %v1202
    %v1941 = vmul.f32 %v1936, %v1202
    %v1942 = vmul.f32 %v1938, %v1202
    %v1943 = vsub.f32 %v1927, %v1939
    %v1944 = vsub.f32 %v1928, %v1940
    %v1945 = vsub.f32 %v1929, %v1941
    %v1946 = vsub.f32 %v1930, %v1942
    %v1947 = vmul.f32 %v1943, %v1943
    %v1948 = vmul.f32 %v1944, %v1944
    %v1949 = vmul.f32 %v1945, %v1945
    %v1950 = vmul.f32 %v1946, %v1946
    %1951 = vadd.xlane.f32.xlu0 %v1947
    %v1952 = vpop.xlane.xlu0 %1951
    %1953 = vadd.xlane.f32.xlu0 %v1948
    %v1954 = vpop.xlane.xlu0 %1953
    %1955 = vadd.xlane.f32.xlu0 %v1949
    %v1956 = vpop.xlane.xlu0 %1955
    %1957 = vadd.xlane.f32.xlu0 %v1950
    %v1958 = vpop.xlane.xlu0 %1957
    %v1959 = vmul.f32 %v1952, 0.007874016
    %v1960 = vmul.f32 %v1954, 0.007874016
    %v1961 = vmul.f32 %v1956, 0.007874016
    %v1962 = vmul.f32 %v1958, 0.007874016
    %v1963 = vrcp.pop %v1959
    %v1964 = vmul.f32 %v1959, %v1963
    %v1965 = vsub.f32 1.0, %v1964
    %v1966 = vmul.f32 %v1963, %v1965
    %v1967 = vadd.f32 %v1963, %v1966
    %vm1968 = vweird.f32 %v1959
    %vm1969 = vweird.f32 %v1963
    %vm1970 = vmor %vm1968, %vm1969
    %v1971 = vsel %vm1970, %v1963, %v1967
    %v1972 = vand.u32 2147483647, %v1959
    %vm1973 = vcmp.eq.f32.partialorder %v1972, 8.507059e+37
    %v1974 = vand.u32 %v1959, 2147483648
    %v1975 = vor.u32 1.1754944e-38, %v1974
    %v1976 = vsel %vm1973, %v1975, %v1971
    %v1977 = vmul.f32 %v1943, %v1976
    %v1978 = vrcp.pop %v1960
    %v1979 = vmul.f32 %v1960, %v1978
    %v1980 = vsub.f32 1.0, %v1979
    %v1981 = vmul.f32 %v1978, %v1980
    %v1982 = vadd.f32 %v1978, %v1981
    %vm1983 = vweird.f32 %v1960
    %vm1984 = vweird.f32 %v1978
    %vm1985 = vmor %vm1983, %vm1984
    %v1986 = vsel %vm1985, %v1978, %v1982
    %v1987 = vand.u32 2147483647, %v1960
    %vm1988 = vcmp.eq.f32.partialorder %v1987, 8.507059e+37
    %v1989 = vand.u32 %v1960, 2147483648
    %v1990 = vor.u32 1.1754944e-38, %v1989
    %v1991 = vsel %vm1988, %v1990, %v1986
    %v1992 = vmul.f32 %v1944, %v1991
    %v1993 = vrcp.pop %v1961
    %v1994 = vmul.f32 %v1961, %v1993
    %v1995 = vsub.f32 1.0, %v1994
    %v1996 = vmul.f32 %v1993, %v1995
    %v1997 = vadd.f32 %v1993, %v1996
    %vm1998 = vweird.f32 %v1961
    %vm1999 = vweird.f32 %v1993
    %vm2000 = vmor %vm1998, %vm1999
    %v2001 = vsel %vm2000, %v1993, %v1997
    %v2002 = vand.u32 2147483647, %v1961
    %vm2003 = vcmp.eq.f32.partialorder %v2002, 8.507059e+37
    %v2004 = vand.u32 %v1961, 2147483648
    %v2005 = vor.u32 1.1754944e-38, %v2004
    %v2006 = vsel %vm2003, %v2005, %v2001
    %v2007 = vmul.f32 %v1945, %v2006
    %v2008 = vrcp.pop %v1962
    %v2009 = vmul.f32 %v1962, %v2008
    %v2010 = vsub.f32 1.0, %v2009
    %v2011 = vmul.f32 %v2008, %v2010
    %v2012 = vadd.f32 %v2008, %v2011
    %vm2013 = vweird.f32 %v1962
    %vm2014 = vweird.f32 %v2008
    %vm2015 = vmor %vm2013, %vm2014
    %v2016 = vsel %vm2015, %v2008, %v2012
    %v2017 = vand.u32 2147483647, %v1962
    %vm2018 = vcmp.eq.f32.partialorder %v2017, 8.507059e+37
    %v2019 = vand.u32 %v1962, 2147483648
    %v2020 = vor.u32 1.1754944e-38, %v2019
    %v2021 = vsel %vm2018, %v2020, %v2016
    %v2022 = vmul.f32 %v1946, %v2021
    %2023 = vst [vmem:[#allocation2] sm:$0xff] %v1977
    %2024 = vst [vmem:[#allocation2 + $0x8] sm:$0xff] %v1992
    %2025 = vst [vmem:[#allocation2 + $0x10] sm:$0xff] %v2007
    %2026 = vst [vmem:[#allocation2 + $0x18] sm:$0xff] %v2022
    // Predicated region
    $region42: #{encoder_transformer_layer.1} parent=1 // pred_check
      _
    $region43: #{encoder_transformer_layer.1} parent=1 // pred_check_branch
      %2028 = sbr.rel (0) target = $region45
    $region44: #{encoder_transformer_layer.1} parent=1 // pred_region
      %2030 = vsyncadd [#allocation3], 0
      %s2031 = sshll.u32 [#allocation2], 4
      %s2032 = int_to_ptr.vmem [resolvable:$true] %s2031
      %s2033 = sshll.u32 %s10, 4
      %s2034 = int_to_ptr.hbm [resolvable:$true] %s2033
      %2039 = dma.vmem_to_hbm [thread:$0]  %s2032, 512, %s2034, [#allocation3], 128, 128, 8
    $region45: #{encoder_transformer_layer.1} parent=1 // pred_fallthru
      _
    // Predicated region
    $region46: #{encoder_transformer_layer.1} parent=1 // pred_check
      _
    $region47: #{encoder_transformer_layer.1} parent=1 // pred_check_branch
      %2041 = sbr.rel (0) target = $region49
    $region48: #{encoder_transformer_layer.1} parent=1 // pred_region
      %2043 = dma.done [#allocation3], 512
    $region49: #{encoder_transformer_layer.1} parent=1 // pred_fallthru
      _
    %2044 = vsyncpa [#allocation3], 1

</llo_original>
